<compile_context>
chip_gen: v5e
topology: v5e:2x2
jax: 0.10.0
libtpu: 0.0.40
codegen_flags: <defaults>
</compile_context>

<pallas_src>
import jax
import jax.numpy as jnp
from jax.experimental import pallas as pl
from jax.experimental.pallas import tpu as pltpu

EPS = 1e-5


def fused_mul_conv_bn_kernel(x_ref, s_ref, w_ref, g_ref, b_ref,
                             y_ref, mean_ref, var_ref, acc_ref):
    # Grid: (i over Cout blocks [parallel], k over Cin blocks [arbitrary]).
    # x_ref:    (NK, TK, M)   bf16, VMEM-resident (constant block index)
    # s_ref:    (NK, 1, TK)   f32,  VMEM-resident per-input-channel scale
    # w_ref:    (1, 1, TC, TK) bf16, streamed per (i, k)
    # g_ref/b_ref: (TC, 1)    f32 BN gamma / beta for this Cout block
    # y_ref:    (TC, M)       f32 normalized output block
    # mean_ref/var_ref: (TC, 1) f32 batch stats (biased var)
    # acc_ref:  (TC, M)       f32 scratch accumulator
    k = pl.program_id(1)
    nk = pl.num_programs(1)

    @pl.when(k == 0)
    def _init():
        acc_ref[...] = jnp.zeros_like(acc_ref)

    # Fold the per-input-channel scale into the (small) weight chunk instead of
    # scaling x, then cast back to bf16 so the MXU matmul runs natively.
    w = (w_ref[0, 0].astype(jnp.float32) * s_ref[k]).astype(jnp.bfloat16)  # (TC, TK)
    acc_ref[...] += jnp.dot(w, x_ref[k], preferred_element_type=jnp.float32)  # (TC, M)

    @pl.when(k == nk - 1)
    def _finalize():
        y = acc_ref[...]                                       # (TC, M) f32
        inv_m = 1.0 / y.shape[1]
        mean = jnp.sum(y, axis=1, keepdims=True) * inv_m       # (TC, 1)
        centered = y - mean
        # Two-pass (shifted) variance: robust against cancellation.
        var = jnp.sum(centered * centered, axis=1, keepdims=True) * inv_m
        a = jax.lax.rsqrt(var + EPS) * g_ref[...]              # (TC, 1)
        y_ref[...] = centered * a + b_ref[...]
        mean_ref[...] = mean
        var_ref[...] = var


def fused_mul_conv_bn(x219, x224, conv_w, gamma, beta, *,
                      cout_blocks=1, cin_blocks=2):
    """x219: (N, Cin, H, W), x224: (N, Cin, 1, 1), conv_w: (Cout, Cin, 1, 1).

    Returns (normalized_out (N, Cout, H, W), batch_mean (Cout,), batch_var (Cout,)).
    cout_blocks=2 engages the megacore ("parallel") Cout split for dual-TC chips
    (v7x); cout_blocks=1 is the single-TensorCore (v5e/v6e) default.
    """
    N, Cin, H, W = x219.shape
    Cout = conv_w.shape[0]
    # TODO(synk): kernel assumes N == 1 (as in the source module); N > 1 needs a
    # batch grid axis and BN stats reduced over the batch as well.
    assert N == 1, "fused_mul_conv_bn currently supports N == 1 only"
    M = H * W
    assert Cin % cin_blocks == 0 and Cout % cout_blocks == 0
    TK = Cin // cin_blocks
    TC = Cout // cout_blocks
    assert TK % 16 == 0 and TC % 8 == 0, "tile sizes must respect TPU tiling"

    # bf16 dot operands; zero-copy reshapes otherwise (no HBM transposes of x).
    # In production: cast/relayout upstream (weights are static -> one-time).
    x3d = x219.reshape(cin_blocks, TK, M).astype(jnp.bfloat16)          # (NK, TK, M)
    w4d = (conv_w.reshape(cout_blocks, TC, cin_blocks, TK)
                 .transpose(0, 2, 1, 3)
                 .astype(jnp.bfloat16))                                  # (NI, NK, TC, TK)
    s3d = x224.reshape(cin_blocks, 1, TK).astype(jnp.float32)            # (NK, 1, TK)
    g2d = gamma.reshape(Cout, 1).astype(jnp.float32)
    b2d = beta.reshape(Cout, 1).astype(jnp.float32)

    cost = pl.CostEstimate(
        flops=2 * M * Cin * Cout + 8 * M * Cout + 2 * Cout * Cin,
        transcendentals=Cout,
        bytes_accessed=2 * (Cin * M + Cout * Cin)          # bf16 x, w
        + 4 * (Cin + 2 * Cout)                             # f32 scale, gamma, beta
        + 4 * (Cout * M + 2 * Cout),                       # f32 out + stats
    )

    out, bmean, bvar = pl.pallas_call(
        fused_mul_conv_bn_kernel,
        out_shape=(
            jax.ShapeDtypeStruct((Cout, M), jnp.float32),
            jax.ShapeDtypeStruct((Cout, 1), jnp.float32),
            jax.ShapeDtypeStruct((Cout, 1), jnp.float32),
        ),
        grid_spec=pltpu.PrefetchScalarGridSpec(
            num_scalar_prefetch=0,
            grid=(cout_blocks, cin_blocks),
            in_specs=[
                # x: whole array resident in VMEM (constant block index -> DMA'd once).
                pl.BlockSpec((cin_blocks, TK, M), lambda i, k: (0, 0, 0)),
                # per-input-channel scale: tiny, resident.
                pl.BlockSpec((cin_blocks, 1, TK), lambda i, k: (0, 0, 0)),
                # weight: streamed one (TC, TK) chunk per grid step (pipelined).
                pl.BlockSpec((1, 1, TC, TK), lambda i, k: (i, k, 0, 0)),
                pl.BlockSpec((TC, 1), lambda i, k: (i, 0)),
                pl.BlockSpec((TC, 1), lambda i, k: (i, 0)),
            ],
            out_specs=[
                pl.BlockSpec((TC, M), lambda i, k: (i, 0)),
                pl.BlockSpec((TC, 1), lambda i, k: (i, 0)),
                pl.BlockSpec((TC, 1), lambda i, k: (i, 0)),
            ],
            scratch_shapes=[pltpu.VMEM((TC, M), jnp.float32)],
        ),
        compiler_params=pltpu.CompilerParams(
            dimension_semantics=("parallel", "arbitrary")),
        cost_estimate=cost,
    )(x3d, s3d, w4d, g2d, b2d)

    # (Cout, M) -> (N, Cout, H, W): no transpose needed.
    return out.reshape(N, Cout, H, W), bmean.reshape(Cout), bvar.reshape(Cout)


def update_running_stats(running_mean, running_var, batch_mean, batch_var_biased,
                         n_elems, momentum=0.1):
    """PyTorch BatchNorm2d training-mode side effect (EMA with unbiased var)."""
    unbiased = batch_var_biased * (n_elems / (n_elems - 1.0))
    new_mean = (1.0 - momentum) * running_mean + momentum * batch_mean
    new_var = (1.0 - momentum) * running_var + momentum * unbiased
    return new_mean, new_var


def reference(x219, x224, conv_w, gamma, beta):
    """Pure-f32 reference faithful to the PyTorch module (training-mode BN)."""
    x = x224 * x219
    y = jax.lax.conv_general_dilated(
        x, conv_w, window_strides=(1, 1), padding="VALID",
        dimension_numbers=("NCHW", "OIHW", "NCHW"),
        precision=jax.lax.Precision.HIGHEST)
    mean = jnp.mean(y, axis=(0, 2, 3), keepdims=True)
    var = jnp.mean((y - mean) ** 2, axis=(0, 2, 3), keepdims=True)
    out = (y - mean) * jax.lax.rsqrt(var + EPS) * gamma.reshape(1, -1, 1, 1) \
        + beta.reshape(1, -1, 1, 1)
    return out, mean.reshape(-1), var.reshape(-1)


if __name__ == "__main__":
    # Shapes implied by the module: (1, 672, 14, 14) activations, 672->112 1x1 conv.
    N, Cin, Cout, H, W = 1, 672, 112, 14, 14

    key = jax.random.PRNGKey(0)
    k1, k2, k3 = jax.random.split(key, 3)
    x219 = jax.random.normal(k1, (N, Cin, H, W), dtype=jnp.float32)
    x224 = jax.random.normal(k2, (N, Cin, 1, 1), dtype=jnp.float32)
    conv_w = jax.random.normal(k3, (Cout, Cin, 1, 1), dtype=jnp.float32) * 0.02
    gamma = jnp.ones((Cout,), dtype=jnp.float32)   # BatchNorm2d default init
    beta = jnp.zeros((Cout,), dtype=jnp.float32)

    ref_out, ref_mean, ref_var = reference(x219, x224, conv_w, gamma, beta)
    ref_out = jax.block_until_ready(ref_out)

    # bf16 matmul operands -> compare against the f32 reference with a
    # mixed-precision tolerance (observed errors ~1e-2 after BN normalization).
    for cout_blocks in (1, 2):   # 1: single-TC (v5e/v6e); 2: dual-TC split (v7x)
        out, bmean, bvar = fused_mul_conv_bn(
            x219, x224, conv_w, gamma, beta, cout_blocks=cout_blocks)
        out = jax.block_until_ready(out)
        assert out.shape == (N, Cout, H, W), out.shape
        err = float(jnp.max(jnp.abs(out - ref_out)))
        assert jnp.allclose(out, ref_out, atol=5e-2, rtol=5e-2), \
            f"cout_blocks={cout_blocks} max|err|={err}"
        assert jnp.allclose(bmean, ref_mean, atol=1e-2, rtol=1e-2)
        assert jnp.allclose(bvar, ref_var, atol=1e-2, rtol=1e-2)
        # Exercise the PyTorch-style running-stats update (side effect only).
        rm, rv = update_running_stats(jnp.zeros(Cout), jnp.ones(Cout),
                                      bmean, bvar, n_elems=N * H * W)
        jax.block_until_ready((rm, rv))

    print("KERNEL_OK")
</pallas_src>

<mosaic_0001>
module attributes {stable_mosaic.version = 11 : i64} {
  func.func @fused_mul_conv_bn_kernel(%arg0: i32, %arg1: i32, %arg2: memref<2x336x196xbf16, #tpu.memory_space<vmem>>, %arg3: memref<2x1x336xf32, #tpu.memory_space<vmem>>, %arg4: memref<1x1x112x336xbf16, #tpu.memory_space<vmem>>, %arg5: memref<112x1xf32, #tpu.memory_space<vmem>>, %arg6: memref<112x1xf32, #tpu.memory_space<vmem>>, %arg7: memref<112x196xf32, #tpu.memory_space<vmem>>, %arg8: memref<112x1xf32, #tpu.memory_space<vmem>>, %arg9: memref<112x1xf32, #tpu.memory_space<vmem>>, %arg10: memref<112x196xf32, #tpu.memory_space<vmem>>) attributes {dimension_semantics = [#tpu.dimension_semantics<parallel>, #tpu.dimension_semantics<arbitrary>], iteration_bounds = array<i64: 1, 2>, scalar_prefetch = 0 : i64, scratch_operands = 1 : i64, tpu.core_type = #tpu.core_type<tc>, window_params = [{pipeline_mode = #tpu.pipeline_mode<synchronous>, transform_indices = @transform_0, window_bounds = array<i64: 2, 336, 196>}, {pipeline_mode = #tpu.pipeline_mode<synchronous>, transform_indices = @transform_1, window_bounds = array<i64: 2, 1, 336>}, {transform_indices = @transform_2, window_bounds = array<i64: 1, 1, 112, 336>}, {transform_indices = @transform_3, window_bounds = array<i64: 112, 1>}, {transform_indices = @transform_4, window_bounds = array<i64: 112, 1>}, {transform_indices = @transform_5, window_bounds = array<i64: 112, 196>}, {transform_indices = @transform_6, window_bounds = array<i64: 112, 1>}, {transform_indices = @transform_7, window_bounds = array<i64: 112, 1>}]} {
    %c0_i32 = arith.constant 0 : i32
    %0 = arith.cmpi eq, %arg1, %c0_i32 : i32
    %1 = arith.extui %0 : i1 to i32
    %c0_i32_0 = arith.constant 0 : i32
    %2 = arith.cmpi ne, %1, %c0_i32_0 : i32
    scf.if %2 {
      %cst_13 = arith.constant 0.000000e+00 : f32
      %22 = vector.broadcast %cst_13 : f32 to vector<112x196xf32>
      %c0_14 = arith.constant 0 : index
      %c0_15 = arith.constant 0 : index
      %23 = vector.load %arg10[%c0_14, %c0_15] : memref<112x196xf32, #tpu.memory_space<vmem>>, vector<112x196xf32>
      tpu.vector_store %arg10[%c0_14, %c0_15], %22 {strides = array<i32>} : memref<112x196xf32, #tpu.memory_space<vmem>>, vector<112x196xf32>,
    } else {
    }
    %c0 = arith.constant 0 : index
    %c0_1 = arith.constant 0 : index
    %c0_2 = arith.constant 0 : index
    %c0_3 = arith.constant 0 : index
    %3 = vector.load %arg4[%c0, %c0_1, %c0_2, %c0_3] : memref<1x1x112x336xbf16, #tpu.memory_space<vmem>>, vector<1x1x112x336xbf16>
    %4 = vector.shape_cast %3 : vector<1x1x112x336xbf16> to vector<112x336xbf16>
    %5 = arith.extf %4 : vector<112x336xbf16> to vector<112x336xf32>
    %6 = arith.index_cast %arg1 : i32 to index
    %c0_4 = arith.constant 0 : index
    %c0_5 = arith.constant 0 : index
    %7 = vector.load %arg3[%6, %c0_4, %c0_5] : memref<2x1x336xf32, #tpu.memory_space<vmem>>, vector<1x1x336xf32>
    %8 = vector.shape_cast %7 : vector<1x1x336xf32> to vector<1x336xf32>
    %9 = vector.broadcast %8 : vector<1x336xf32> to vector<112x336xf32>
    %10 = arith.mulf %5, %9 : vector<112x336xf32>
    %11 = arith.truncf %10 : vector<112x336xf32> to vector<112x336xbf16>
    %c0_6 = arith.constant 0 : index
    %c0_7 = arith.constant 0 : index
    %12 = vector.load %arg10[%c0_6, %c0_7] : memref<112x196xf32, #tpu.memory_space<vmem>>, vector<112x196xf32>
    %13 = arith.index_cast %arg1 : i32 to index
    %c0_8 = arith.constant 0 : index
    %c0_9 = arith.constant 0 : index
    %14 = vector.load %arg2[%13, %c0_8, %c0_9] : memref<2x336x196xbf16, #tpu.memory_space<vmem>>, vector<1x336x196xbf16>
    %15 = vector.shape_cast %14 : vector<1x336x196xbf16> to vector<336x196xbf16>
    %cst = arith.constant dense<0.000000e+00> : vector<112x196xf32>
    %16 = tpu.matmul %11, %15, %cst {dimension_numbers = #tpu.dot_dimension_numbers<[1], [0], [0], [1], [0, 0, 1, 1], [], []>} : vector<112x336xbf16>, vector<336x196xbf16>, vector<112x196xf32> -> vector<112x196xf32>
    %17 = arith.addf %12, %16 : vector<112x196xf32>
    %c0_10 = arith.constant 0 : index
    %c0_11 = arith.constant 0 : index
    %18 = vector.load %arg10[%c0_10, %c0_11] : memref<112x196xf32, #tpu.memory_space<vmem>>, vector<112x196xf32>
    tpu.vector_store %arg10[%c0_10, %c0_11], %17 {strides = array<i32>} : memref<112x196xf32, #tpu.memory_space<vmem>>, vector<112x196xf32>,
    %c1_i32 = arith.constant 1 : i32
    %19 = arith.cmpi eq, %arg1, %c1_i32 : i32
    %20 = arith.extui %19 : i1 to i32
    %c0_i32_12 = arith.constant 0 : i32
    %21 = arith.cmpi ne, %20, %c0_i32_12 : i32
    scf.if %21 {
      %c0_13 = arith.constant 0 : index
      %c0_14 = arith.constant 0 : index
      %22 = vector.load %arg10[%c0_13, %c0_14] : memref<112x196xf32, #tpu.memory_space<vmem>>, vector<112x196xf32>
      %cst_15 = arith.constant dense<0.000000e+00> : vector<112xf32>
      %23 = vector.multi_reduction <add>, %22, %cst_15 [1] : vector<112x196xf32> to vector<112xf32>
      %24 = vector.shape_cast %23 : vector<112xf32> to vector<112x1xf32>
      %cst_16 = arith.constant 0.00510204071 : f32
      %25 = vector.broadcast %cst_16 : f32 to vector<112x1xf32>
      %26 = arith.mulf %24, %25 : vector<112x1xf32>
      %27 = vector.broadcast %26 : vector<112x1xf32> to vector<112x196xf32>
      %28 = arith.subf %22, %27 : vector<112x196xf32>
      %29 = arith.mulf %28, %28 : vector<112x196xf32>
      %cst_17 = arith.constant dense<0.000000e+00> : vector<112xf32>
      %30 = vector.multi_reduction <add>, %29, %cst_17 [1] : vector<112x196xf32> to vector<112xf32>
      %31 = vector.shape_cast %30 : vector<112xf32> to vector<112x1xf32>
      %cst_18 = arith.constant 0.00510204071 : f32
      %32 = vector.broadcast %cst_18 : f32 to vector<112x1xf32>
      %33 = arith.mulf %31, %32 : vector<112x1xf32>
      %cst_19 = arith.constant 9.99999974E-6 : f32
      %34 = vector.broadcast %cst_19 : f32 to vector<112x1xf32>
      %35 = arith.addf %33, %34 : vector<112x1xf32>
      %36 = math.rsqrt %35 : vector<112x1xf32>
      %c0_20 = arith.constant 0 : index
      %c0_21 = arith.constant 0 : index
      %37 = vector.load %arg5[%c0_20, %c0_21] : memref<112x1xf32, #tpu.memory_space<vmem>>, vector<112x1xf32>
      %38 = arith.mulf %36, %37 : vector<112x1xf32>
      %39 = vector.broadcast %38 : vector<112x1xf32> to vector<112x196xf32>
      %40 = arith.mulf %28, %39 : vector<112x196xf32>
      %c0_22 = arith.constant 0 : index
      %c0_23 = arith.constant 0 : index
      %41 = vector.load %arg6[%c0_22, %c0_23] : memref<112x1xf32, #tpu.memory_space<vmem>>, vector<112x1xf32>
      %42 = vector.broadcast %41 : vector<112x1xf32> to vector<112x196xf32>
      %43 = arith.addf %40, %42 : vector<112x196xf32>
      %c0_24 = arith.constant 0 : index
      %c0_25 = arith.constant 0 : index
      %44 = vector.load %arg7[%c0_24, %c0_25] : memref<112x196xf32, #tpu.memory_space<vmem>>, vector<112x196xf32>
      tpu.vector_store %arg7[%c0_24, %c0_25], %43 {strides = array<i32>} : memref<112x196xf32, #tpu.memory_space<vmem>>, vector<112x196xf32>,
      %c0_26 = arith.constant 0 : index
      %c0_27 = arith.constant 0 : index
      %45 = vector.load %arg8[%c0_26, %c0_27] : memref<112x1xf32, #tpu.memory_space<vmem>>, vector<112x1xf32>
      tpu.vector_store %arg8[%c0_26, %c0_27], %26 {strides = array<i32>} : memref<112x1xf32, #tpu.memory_space<vmem>>, vector<112x1xf32>,
      %c0_28 = arith.constant 0 : index
      %c0_29 = arith.constant 0 : index
      %46 = vector.load %arg9[%c0_28, %c0_29] : memref<112x1xf32, #tpu.memory_space<vmem>>, vector<112x1xf32>
      tpu.vector_store %arg9[%c0_28, %c0_29], %33 {strides = array<i32>} : memref<112x1xf32, #tpu.memory_space<vmem>>, vector<112x1xf32>,
    } else {
    }
    return
  }
  func.func @transform_0(%arg0: i32, %arg1: i32) -> (i32, i32, i32) {
    %c0_i32 = arith.constant 0 : i32
    %c0_i32_0 = arith.constant 0 : i32
    %c0_i32_1 = arith.constant 0 : i32
    %c0_i32_2 = arith.constant 0 : i32
    return %c0_i32, %c0_i32_0, %c0_i32_1 : i32, i32, i32
  }
  func.func @transform_1(%arg0: i32, %arg1: i32) -> (i32, i32, i32) {
    %c0_i32 = arith.constant 0 : i32
    %c0_i32_0 = arith.constant 0 : i32
    %c0_i32_1 = arith.constant 0 : i32
    %c0_i32_2 = arith.constant 0 : i32
    return %c0_i32, %c0_i32_0, %c0_i32_1 : i32, i32, i32
  }
  func.func @transform_2(%arg0: i32, %arg1: i32) -> (i32, i32, i32, i32) {
    %c0_i32 = arith.constant 0 : i32
    %c0_i32_0 = arith.constant 0 : i32
    %c0_i32_1 = arith.constant 0 : i32
    return %arg0, %arg1, %c0_i32, %c0_i32_0 : i32, i32, i32, i32
  }
  func.func @transform_3(%arg0: i32, %arg1: i32) -> (i32, i32) {
    %c0_i32 = arith.constant 0 : i32
    %c0_i32_0 = arith.constant 0 : i32
    return %arg0, %c0_i32 : i32, i32
  }
  func.func @transform_4(%arg0: i32, %arg1: i32) -> (i32, i32) {
    %c0_i32 = arith.constant 0 : i32
    %c0_i32_0 = arith.constant 0 : i32
    return %arg0, %c0_i32 : i32, i32
  }
  func.func @transform_5(%arg0: i32, %arg1: i32) -> (i32, i32) {
    %c0_i32 = arith.constant 0 : i32
    %c0_i32_0 = arith.constant 0 : i32
    return %arg0, %c0_i32 : i32, i32
  }
  func.func @transform_6(%arg0: i32, %arg1: i32) -> (i32, i32) {
    %c0_i32 = arith.constant 0 : i32
    %c0_i32_0 = arith.constant 0 : i32
    return %arg0, %c0_i32 : i32, i32
  }
  func.func @transform_7(%arg0: i32, %arg1: i32) -> (i32, i32) {
    %c0_i32 = arith.constant 0 : i32
    %c0_i32_0 = arith.constant 0 : i32
    return %arg0, %c0_i32 : i32, i32
  }
}

</mosaic_0001>

<llo_original>
// kernel: tpu_custom_call.1
$region0: #{tpu_custom_call.1}
  #allocation0 [shape = 'u32[]', space=smem, size = 0x4, offset = 0x4, fixed_abs, tag = 'smem constant byte address 0x4 - core index']
  #allocation1 [shape = 'u32[72,128]{1,0:T(1,128)}', space=vmem, size = 0x9000, scoped, tag = 'internal scratch']
  #allocation2 [shape = 'f32[112,196]{1,0:T(8,128)}', space=vmem, size = 0x1c000, scoped, tag = 'scratch operand']
  %s0 = inlined_call_operand.vmem [shape: bf16[2,336,196], index: 0, kind: input, shape index: {}]
  %s1 = inlined_call_operand.vmem [shape: f32[2,1,336], index: 1, kind: input, shape index: {}]
  %s2 = inlined_call_operand.vmem [shape: bf16[1,2,112,336], index: 2, kind: input, shape index: {}]
  %s3 = inlined_call_operand.vmem [shape: f32[112,1], index: 3, kind: input, shape index: {}]
  %s4 = inlined_call_operand.vmem [shape: f32[112,1], index: 4, kind: input, shape index: {}]
  %s5 = inlined_call_operand.vmem [shape: f32[112,196], index: 5, kind: output, shape index: {0}]
  %s6 = inlined_call_operand.vmem [shape: f32[112,1], index: 6, kind: output, shape index: {1}]
  %s7 = inlined_call_operand.vmem [shape: f32[112,1], index: 7, kind: output, shape index: {2}]
  %8 = xla_tuple %s5, %s6, %s7
  %s9 = sld [smem:[#allocation0]]
  $region77: #{tpu_custom_call.1} parent=0
    _
  %s11 = ssub.s32 1, %s9
  %s12 = scalar_select 0, %s11, %s9
  loop: start=0, step=1, limit=4
  $region2: #{tpu_custom_call.1} parent=0 // loop_pre_header
    _
  $region3: #{tpu_custom_call.1} parent=0 // loop_header
    %s14 = sphi 0, %s18
    %p15 = scmp.ge.s32.totalorder %s14, 4
    %s21 = sphi 0, %s33
    %s22 = sphi 0, %s29
    %s23 = sphi 0, %s21
    %s24 = sphi 0, %s22
    %s25 = sphi 0, %s23
    %s26 = sphi 0, %s24
    %s34 = sphi 0, %s34
    %s36 = sphi 0, %s34
    %s37 = sphi 0, %s36
    %s51 = sphi 0, %s37
    %s55 = sphi 0, %s55
    %s57 = sphi 0, %s55
    %s58 = sphi 0, %s57
    %s72 = sphi 0, %s58
    %s80 = sphi 0, %s82
    %s83 = sphi 0, %s80
    %s84 = sphi 0, %s83
    %s100 = sphi 0, %s84
    %s106 = sphi 0, %s108
    %s109 = sphi 0, %s106
    %s110 = sphi 0, %s109
    %s126 = sphi 0, %s110
    %s132 = sphi 0, %s134
    %s135 = sphi 0, %s132
    %s136 = sphi 0, %s135
    %s152 = sphi 0, %s136
    %s158 = sphi 0, %s160
    %s161 = sphi 0, %s158
    %s162 = sphi 0, %s161
    %s178 = sphi 0, %s162
    %s184 = sphi 0, %s186
    %s187 = sphi 0, %s184
    %s188 = sphi 0, %s187
    %s204 = sphi 0, %s188
    %s210 = sphi 0, %s212
    %s213 = sphi 0, %s210
    %s214 = sphi 0, %s213
    %s230 = sphi 0, %s214
  $region4: #{tpu_custom_call.1} parent=0 // loop_header_branch
    %17 = sbr.rel (%p15) target = $region8
  $region5: #{tpu_custom_call.1} parent=0 // loop_body
    %s19 = ssub.s32 %s14, 1
    %s20 = ssub.s32 %s14, 2
    %s27 = sadd.s32 1, %s22
    %p28 = scmp.ge.s32.totalorder %s27, 2
    %s29 = scalar_select %p28, 0, %s27
    %s30 = sadd.s32 1, %s21
    %s31 = scalar_select %p28, %s30, %s21
    %p32 = scmp.ge.s32.totalorder %s31, 1
    %s33 = scalar_select %p32, 0, %s31
    %s35 = sadd.s32 %s34, 1
    %p38 = scmp.eq.s32.totalorder %s14, 1
    %p39 = scmp.ne.s32.totalorder %s34, %s36
    %p40 = scmp.eq.s32.totalorder %s14, 0
    %p41 = por %p39, %p40
    %p42 = scmp.ne.s32.totalorder %s34, %s36
    %p43 = scmp.eq.s32.totalorder %s19, 1
    %p44 = por %p42, %p43
    %p45 = scmp.ne.s32.totalorder %s36, %s37
    %p46 = scmp.eq.s32.totalorder %s19, 0
    %p47 = por %p45, %p46
    %p48 = scmp.ne.s32.totalorder %s36, %s37
    %p49 = scmp.eq.s32.totalorder %s20, 1
    %p50 = por %p48, %p49
    %p52 = scmp.ne.s32.totalorder %s37, %s51
    %p53 = scmp.eq.s32.totalorder %s20, 0
    %p54 = por %p52, %p53
    %s56 = sadd.s32 %s55, 1
    %p59 = scmp.eq.s32.totalorder %s14, 1
    %p60 = scmp.ne.s32.totalorder %s55, %s57
    %p61 = scmp.eq.s32.totalorder %s14, 0
    %p62 = por %p60, %p61
    %p63 = scmp.ne.s32.totalorder %s55, %s57
    %p64 = scmp.eq.s32.totalorder %s19, 1
    %p65 = por %p63, %p64
    %p66 = scmp.ne.s32.totalorder %s57, %s58
    %p67 = scmp.eq.s32.totalorder %s19, 0
    %p68 = por %p66, %p67
    %p69 = scmp.ne.s32.totalorder %s57, %s58
    %p70 = scmp.eq.s32.totalorder %s20, 1
    %p71 = por %p69, %p70
    %p73 = scmp.ne.s32.totalorder %s58, %s72
    %p74 = scmp.eq.s32.totalorder %s20, 0
    %p75 = por %p73, %p74
    %s76 = ssub.s32 %s21, %s33
    %s77 = ssub.s32 %s22, %s29
    %s78 = sor.u32 %s76, %s77
    %p79 = scmp.eq.s32.totalorder %s78, 0
    %s81 = sadd.s32 %s80, 1
    %s82 = scalar_select %p79, %s80, %s81
    %p85 = pneg %p79
    %p86 = scmp.eq.s32.totalorder %s14, 1
    %p87 = por %p85, %p86
    %p88 = scmp.ne.s32.totalorder %s80, %s83
    %p89 = scmp.eq.s32.totalorder %s14, 0
    %p90 = por %p88, %p89
    %p91 = scmp.ne.s32.totalorder %s80, %s83
    %p92 = scmp.eq.s32.totalorder %s19, 1
    %p93 = por %p91, %p92
    %p94 = scmp.ne.s32.totalorder %s83, %s84
    %p95 = scmp.eq.s32.totalorder %s19, 0
    %p96 = por %p94, %p95
    %p97 = scmp.ne.s32.totalorder %s83, %s84
    %p98 = scmp.eq.s32.totalorder %s20, 1
    %p99 = por %p97, %p98
    %p101 = scmp.ne.s32.totalorder %s84, %s100
    %p102 = scmp.eq.s32.totalorder %s20, 0
    %p103 = por %p101, %p102
    %s104 = ssub.s32 %s21, %s33
    %p105 = scmp.eq.s32.totalorder %s104, 0
    %s107 = sadd.s32 %s106, 1
    %s108 = scalar_select %p105, %s106, %s107
    %p111 = pneg %p105
    %p112 = scmp.eq.s32.totalorder %s14, 1
    %p113 = por %p111, %p112
    %p114 = scmp.ne.s32.totalorder %s106, %s109
    %p115 = scmp.eq.s32.totalorder %s14, 0
    %p116 = por %p114, %p115
    %p117 = scmp.ne.s32.totalorder %s106, %s109
    %p118 = scmp.eq.s32.totalorder %s19, 1
    %p119 = por %p117, %p118
    %p120 = scmp.ne.s32.totalorder %s109, %s110
    %p121 = scmp.eq.s32.totalorder %s19, 0
    %p122 = por %p120, %p121
    %p123 = scmp.ne.s32.totalorder %s109, %s110
    %p124 = scmp.eq.s32.totalorder %s20, 1
    %p125 = por %p123, %p124
    %p127 = scmp.ne.s32.totalorder %s110, %s126
    %p128 = scmp.eq.s32.totalorder %s20, 0
    %p129 = por %p127, %p128
    %s130 = ssub.s32 %s21, %s33
    %p131 = scmp.eq.s32.totalorder %s130, 0
    %s133 = sadd.s32 %s132, 1
    %s134 = scalar_select %p131, %s132, %s133
    %p137 = pneg %p131
    %p138 = scmp.eq.s32.totalorder %s14, 1
    %p139 = por %p137, %p138
    %p140 = scmp.ne.s32.totalorder %s132, %s135
    %p141 = scmp.eq.s32.totalorder %s14, 0
    %p142 = por %p140, %p141
    %p143 = scmp.ne.s32.totalorder %s132, %s135
    %p144 = scmp.eq.s32.totalorder %s19, 1
    %p145 = por %p143, %p144
    %p146 = scmp.ne.s32.totalorder %s135, %s136
    %p147 = scmp.eq.s32.totalorder %s19, 0
    %p148 = por %p146, %p147
    %p149 = scmp.ne.s32.totalorder %s135, %s136
    %p150 = scmp.eq.s32.totalorder %s20, 1
    %p151 = por %p149, %p150
    %p153 = scmp.ne.s32.totalorder %s136, %s152
    %p154 = scmp.eq.s32.totalorder %s20, 0
    %p155 = por %p153, %p154
    %s156 = ssub.s32 %s21, %s33
    %p157 = scmp.eq.s32.totalorder %s156, 0
    %s159 = sadd.s32 %s158, 1
    %s160 = scalar_select %p157, %s158, %s159
    %p163 = pneg %p157
    %p164 = scmp.eq.s32.totalorder %s14, 1
    %p165 = por %p163, %p164
    %p166 = scmp.ne.s32.totalorder %s158, %s161
    %p167 = scmp.eq.s32.totalorder %s14, 0
    %p168 = por %p166, %p167
    %p169 = scmp.ne.s32.totalorder %s158, %s161
    %p170 = scmp.eq.s32.totalorder %s19, 1
    %p171 = por %p169, %p170
    %p172 = scmp.ne.s32.totalorder %s161, %s162
    %p173 = scmp.eq.s32.totalorder %s19, 0
    %p174 = por %p172, %p173
    %p175 = scmp.ne.s32.totalorder %s161, %s162
    %p176 = scmp.eq.s32.totalorder %s20, 1
    %p177 = por %p175, %p176
    %p179 = scmp.ne.s32.totalorder %s162, %s178
    %p180 = scmp.eq.s32.totalorder %s20, 0
    %p181 = por %p179, %p180
    %s182 = ssub.s32 %s21, %s33
    %p183 = scmp.eq.s32.totalorder %s182, 0
    %s185 = sadd.s32 %s184, 1
    %s186 = scalar_select %p183, %s184, %s185
    %p189 = pneg %p183
    %p190 = scmp.eq.s32.totalorder %s14, 1
    %p191 = por %p189, %p190
    %p192 = scmp.ne.s32.totalorder %s184, %s187
    %p193 = scmp.eq.s32.totalorder %s14, 0
    %p194 = por %p192, %p193
    %p195 = scmp.ne.s32.totalorder %s184, %s187
    %p196 = scmp.eq.s32.totalorder %s19, 1
    %p197 = por %p195, %p196
    %p198 = scmp.ne.s32.totalorder %s187, %s188
    %p199 = scmp.eq.s32.totalorder %s19, 0
    %p200 = por %p198, %p199
    %p201 = scmp.ne.s32.totalorder %s187, %s188
    %p202 = scmp.eq.s32.totalorder %s20, 1
    %p203 = por %p201, %p202
    %p205 = scmp.ne.s32.totalorder %s188, %s204
    %p206 = scmp.eq.s32.totalorder %s20, 0
    %p207 = por %p205, %p206
    %s208 = ssub.s32 %s21, %s33
    %p209 = scmp.eq.s32.totalorder %s208, 0
    %s211 = sadd.s32 %s210, 1
    %s212 = scalar_select %p209, %s210, %s211
    %p215 = pneg %p209
    %p216 = scmp.eq.s32.totalorder %s14, 1
    %p217 = por %p215, %p216
    %p218 = scmp.ne.s32.totalorder %s210, %s213
    %p219 = scmp.eq.s32.totalorder %s14, 0
    %p220 = por %p218, %p219
    %p221 = scmp.ne.s32.totalorder %s210, %s213
    %p222 = scmp.eq.s32.totalorder %s19, 1
    %p223 = por %p221, %p222
    %p224 = scmp.ne.s32.totalorder %s213, %s214
    %p225 = scmp.eq.s32.totalorder %s19, 0
    %p226 = por %p224, %p225
    %p227 = scmp.ne.s32.totalorder %s213, %s214
    %p228 = scmp.eq.s32.totalorder %s20, 1
    %p229 = por %p227, %p228
    %p231 = scmp.ne.s32.totalorder %s214, %s230
    %p232 = scmp.eq.s32.totalorder %s20, 0
    %p233 = por %p231, %p232
    %p234 = scmp.le.s32.totalorder 1, %s14
    %p235 = scmp.lt.s32.totalorder %s14, 3
    %p236 = pnand %p234, %p235
    %p237 = pneg %p236
    // Predicated region
    $region9: #{tpu_custom_call.1} parent=5 // pred_check
      _
    $region10: #{tpu_custom_call.1} parent=5 // pred_check_branch
      %239 = sbr.rel (%p236) target = $region12
    $region11: #{tpu_custom_call.1} parent=5 // pred_region
      %s240 = ssub.s32 %s14, 1
      // Predicated region
      $region13: #{tpu_custom_call.1} parent=11 // pred_check
        %p241 = pneg %p47
      $region14: #{tpu_custom_call.1} parent=11 // pred_check_branch
        %243 = sbr.rel (%p241) target = $region16
      $region15: #{tpu_custom_call.1} parent=11 // pred_region
        _
      $region16: #{tpu_custom_call.1} parent=11 // pred_fallthru
        _
      // Predicated region
      $region17: #{tpu_custom_call.1} parent=11 // pred_check
        %p244 = pneg %p68
      $region18: #{tpu_custom_call.1} parent=11 // pred_check_branch
        %246 = sbr.rel (%p244) target = $region20
      $region19: #{tpu_custom_call.1} parent=11 // pred_region
        _
      $region20: #{tpu_custom_call.1} parent=11 // pred_fallthru
        _
      // Predicated region
      $region21: #{tpu_custom_call.1} parent=11 // pred_check
        %p247 = pneg %p122
      $region22: #{tpu_custom_call.1} parent=11 // pred_check_branch
        %249 = sbr.rel (%p247) target = $region24
      $region23: #{tpu_custom_call.1} parent=11 // pred_region
        %s250 = smul.u32 14, %s23
        %p251 = scmp.lt.s32.totalorder %s250, 13
        %s252 = scalar_select %p251, %s250, 13
        %s253 = smul.addr %s252, 8
        %s254 = scalar_lea.vmem %s3, %s253
        %s255 = smul.u32 14, %s23
      $region24: #{tpu_custom_call.1} parent=11 // pred_fallthru
        _
      // Predicated region
      $region25: #{tpu_custom_call.1} parent=11 // pred_check
        %p256 = pneg %p148
      $region26: #{tpu_custom_call.1} parent=11 // pred_check_branch
        %258 = sbr.rel (%p256) target = $region28
      $region27: #{tpu_custom_call.1} parent=11 // pred_region
        %s259 = smul.u32 14, %s23
        %p260 = scmp.lt.s32.totalorder %s259, 13
        %s261 = scalar_select %p260, %s259, 13
        %s262 = smul.addr %s261, 8
        %s263 = scalar_lea.vmem %s4, %s262
        %s264 = smul.u32 14, %s23
      $region28: #{tpu_custom_call.1} parent=11 // pred_fallthru
        _
    $region12: #{tpu_custom_call.1} parent=5 // pred_fallthru
      _
    %p265 = scmp.lt.s32.totalorder %s14, 2
    // Predicated region
    $region29: #{tpu_custom_call.1} parent=5 // pred_check
      %p266 = pneg %p265
    $region30: #{tpu_custom_call.1} parent=5 // pred_check_branch
      %268 = sbr.rel (%p266) target = $region32
    $region31: #{tpu_custom_call.1} parent=5 // pred_region
      // Predicated region
      $region33: #{tpu_custom_call.1} parent=31 // pred_check
        %p269 = pneg %p90
      $region34: #{tpu_custom_call.1} parent=31 // pred_check_branch
        %271 = sbr.rel (%p269) target = $region36
      $region35: #{tpu_custom_call.1} parent=31 // pred_region
        %p272 = scmp.lt.s32.totalorder %s21, 0
        %s273 = scalar_select %p272, %s21, 0
        %p274 = scmp.lt.s32.totalorder %s22, 1
        %s275 = scalar_select %p274, %s22, 1
        %s276 = smul.addr %s275, 42
        %s277 = smul.addr %s273, 84
        %s278 = sadd.s32 %s276, %s277
        %s279 = smul.addr %s278, 4
        %s280 = scalar_lea.vmem %s2, %s279
      $region36: #{tpu_custom_call.1} parent=31 // pred_fallthru
        _
    $region32: #{tpu_custom_call.1} parent=5 // pred_fallthru
      _
    %p281 = scmp.le.s32.totalorder 1, %s14
    %p282 = scmp.lt.s32.totalorder %s14, 3
    %p283 = pnand %p281, %p282
    %p284 = pneg %p283
    // Predicated region
    $region37: #{tpu_custom_call.1} parent=5 // pred_check
      _
    $region38: #{tpu_custom_call.1} parent=5 // pred_check_branch
      %286 = sbr.rel (%p283) target = $region40
    $region39: #{tpu_custom_call.1} parent=5 // pred_region
      %s287 = ssub.s32 %s14, 1
      %p288 = pneg %p47
      %p289 = pneg %p44
      %p290 = pneg %p68
      %p291 = pneg %p65
      %p292 = scmp.lt.s32.totalorder %s23, 0
      %s293 = scalar_select %p292, %s23, 0
      %p294 = scmp.lt.s32.totalorder %s24, 1
      %s295 = scalar_select %p294, %s24, 1
      %s296 = smul.addr %s295, 42
      %s297 = smul.addr %s293, 84
      %s298 = sadd.s32 %s296, %s297
      %s299 = smul.addr %s298, 4
      %s300 = scalar_lea.vmem %s2, %s299
      %p301 = pneg %p96
      %p302 = pneg %p93
      %s303 = smul.u32 14, %s23
      %p304 = scmp.lt.s32.totalorder %s303, 13
      %s305 = scalar_select %p304, %s303, 13
      %s306 = smul.addr %s305, 8
      %s307 = scalar_lea.vmem %s3, %s306
      %p308 = pneg %p122
      %p309 = pneg %p119
      %s310 = smul.u32 14, %s23
      %p311 = scmp.lt.s32.totalorder %s310, 13
      %s312 = scalar_select %p311, %s310, 13
      %s313 = smul.addr %s312, 8
      %s314 = scalar_lea.vmem %s4, %s313
      %p315 = pneg %p148
      %p316 = pneg %p145
      %p317 = pneg %p174
      %p318 = pneg %p171
      %s319 = smul.u32 14, %s23
      %p320 = scmp.lt.s32.totalorder %s319, 13
      %s321 = scalar_select %p320, %s319, 13
      %s322 = smul.addr %s321, 2
      %s323 = smul.addr %s322, 8
      %s324 = scalar_lea.vmem %s5, %s323
      %p325 = pneg %p200
      %p326 = pneg %p197
      %s327 = smul.u32 14, %s23
      %p328 = scmp.lt.s32.totalorder %s327, 13
      %s329 = scalar_select %p328, %s327, 13
      %s330 = smul.addr %s329, 8
      %s331 = scalar_lea.vmem %s6, %s330
      %p332 = pneg %p226
      %p333 = pneg %p223
      %s334 = smul.u32 14, %s23
      %p335 = scmp.lt.s32.totalorder %s334, 13
      %s336 = scalar_select %p335, %s334, 13
      %s337 = smul.addr %s336, 8
      %s338 = scalar_lea.vmem %s7, %s337
      %p339 = scmp.lt.s32.totalorder %s23, 0
      %s340 = scalar_select %p339, %s23, 0
      %p341 = scmp.lt.s32.totalorder %s24, 1
      %s342 = scalar_select %p341, %s24, 1
      %s343 = smul.addr %s342, 42
      %s344 = smul.addr %s340, 84
      %s345 = sadd.s32 %s343, %s344
      %s346 = smul.addr %s345, 4
      %s347 = scalar_lea.vmem %s2, %s346
      %s348 = smul.u32 14, %s23
      %p349 = scmp.lt.s32.totalorder %s348, 13
      %s350 = scalar_select %p349, %s348, 13
      %s351 = smul.addr %s350, 8
      %s352 = scalar_lea.vmem %s3, %s351
      %s353 = smul.u32 14, %s23
      %s354 = smul.u32 14, %s23
      %p355 = scmp.lt.s32.totalorder %s354, 13
      %s356 = scalar_select %p355, %s354, 13
      %s357 = smul.addr %s356, 8
      %s358 = scalar_lea.vmem %s4, %s357
      %s359 = smul.u32 14, %s23
      %s360 = smul.u32 14, %s23
      %p361 = scmp.lt.s32.totalorder %s360, 13
      %s362 = scalar_select %p361, %s360, 13
      %s363 = smul.addr %s362, 2
      %s364 = smul.addr %s363, 8
      %s365 = scalar_lea.vmem %s5, %s364
      %s366 = smul.u32 14, %s23
      %s367 = smul.u32 14, %s23
      %p368 = scmp.lt.s32.totalorder %s367, 13
      %s369 = scalar_select %p368, %s367, 13
      %s370 = smul.addr %s369, 8
      %s371 = scalar_lea.vmem %s6, %s370
      %s372 = smul.u32 14, %s23
      %s373 = smul.u32 14, %s23
      %p374 = scmp.lt.s32.totalorder %s373, 13
      %s375 = scalar_select %p374, %s373, 13
      %s376 = smul.addr %s375, 8
      %s377 = scalar_lea.vmem %s7, %s376
      %s378 = smul.u32 14, %s23
      %p380 = scmp.eq.s32.totalorder %s24, 0
      // Predicated region
      $region41: #{tpu_custom_call.1} parent=39 // pred_check
        %p381 = pneg %p380
      $region42: #{tpu_custom_call.1} parent=39 // pred_check_branch
        %383 = sbr.rel (%p381) target = $region44
      $region43: #{tpu_custom_call.1} parent=39 // pred_region
        %384 = vst [vmem:[#allocation2] sm:$0xff] 0.0
        %vm385 = vcmask 556032
        %386 = vst.msk [vmem:[#allocation2 + $0x8] sm:$0xff] %vm385, 0.0
        %387 = vst [vmem:[#allocation2 + $0x10] sm:$0xff] 0.0
        %388 = vst.msk [vmem:[#allocation2 + $0x18] sm:$0xff] %vm385, 0.0
        %389 = vst [vmem:[#allocation2 + $0x20] sm:$0xff] 0.0
        %390 = vst.msk [vmem:[#allocation2 + $0x28] sm:$0xff] %vm385, 0.0
        %391 = vst [vmem:[#allocation2 + $0x30] sm:$0xff] 0.0
        %392 = vst.msk [vmem:[#allocation2 + $0x38] sm:$0xff] %vm385, 0.0
        %393 = vst [vmem:[#allocation2 + $0x40] sm:$0xff] 0.0
        %394 = vst.msk [vmem:[#allocation2 + $0x48] sm:$0xff] %vm385, 0.0
        %395 = vst [vmem:[#allocation2 + $0x50] sm:$0xff] 0.0
        %396 = vst.msk [vmem:[#allocation2 + $0x58] sm:$0xff] %vm385, 0.0
        %397 = vst [vmem:[#allocation2 + $0x60] sm:$0xff] 0.0
        %398 = vst.msk [vmem:[#allocation2 + $0x68] sm:$0xff] %vm385, 0.0
        %399 = vst [vmem:[#allocation2 + $0x70] sm:$0xff] 0.0
        %400 = vst.msk [vmem:[#allocation2 + $0x78] sm:$0xff] %vm385, 0.0
        %401 = vst [vmem:[#allocation2 + $0x80] sm:$0xff] 0.0
        %402 = vst.msk [vmem:[#allocation2 + $0x88] sm:$0xff] %vm385, 0.0
        %403 = vst [vmem:[#allocation2 + $0x90] sm:$0xff] 0.0
        %404 = vst.msk [vmem:[#allocation2 + $0x98] sm:$0xff] %vm385, 0.0
        %405 = vst [vmem:[#allocation2 + $0xa0] sm:$0xff] 0.0
        %406 = vst.msk [vmem:[#allocation2 + $0xa8] sm:$0xff] %vm385, 0.0
        %407 = vst [vmem:[#allocation2 + $0xb0] sm:$0xff] 0.0
        %408 = vst.msk [vmem:[#allocation2 + $0xb8] sm:$0xff] %vm385, 0.0
        %409 = vst [vmem:[#allocation2 + $0xc0] sm:$0xff] 0.0
        %410 = vst.msk [vmem:[#allocation2 + $0xc8] sm:$0xff] %vm385, 0.0
        %411 = vst [vmem:[#allocation2 + $0xd0] sm:$0xff] 0.0
        %412 = vst.msk [vmem:[#allocation2 + $0xd8] sm:$0xff] %vm385, 0.0
      $region44: #{tpu_custom_call.1} parent=39 // pred_fallthru
        _
      %v413 = vld [vmem:[%s347] sm:$0xff]
      %v414 = vld [vmem:[%s347 + $0x8] sm:$0xf]
      %v415 = vld [vmem:[%s347 + $0xc] sm:$0xff]
      %v416 = vld [vmem:[%s347 + $0x14] sm:$0xf]
      %v417 = vld [vmem:[%s347 + $0x18] sm:$0xff]
      %v418 = vld [vmem:[%s347 + $0x20] sm:$0xf]
      %v419 = vld [vmem:[%s347 + $0x24] sm:$0xff]
      %v420 = vld [vmem:[%s347 + $0x2c] sm:$0xf]
      %v421 = vld [vmem:[%s347 + $0x30] sm:$0xff]
      %v422 = vld [vmem:[%s347 + $0x38] sm:$0xf]
      %v423 = vld [vmem:[%s347 + $0x3c] sm:$0xff]
      %v424 = vld [vmem:[%s347 + $0x44] sm:$0xf]
      %v425 = vld [vmem:[%s347 + $0x48] sm:$0xff]
      %v426 = vld [vmem:[%s347 + $0x50] sm:$0xf]
      %v427 = vld [vmem:[%s347 + $0x54] sm:$0xff]
      %v428 = vld [vmem:[%s347 + $0x5c] sm:$0xf]
      %v429 = vld [vmem:[%s347 + $0x60] sm:$0xff]
      %v430 = vld [vmem:[%s347 + $0x68] sm:$0xf]
      %v431 = vld [vmem:[%s347 + $0x6c] sm:$0xff]
      %v432 = vld [vmem:[%s347 + $0x74] sm:$0xf]
      %v433 = vld [vmem:[%s347 + $0x78] sm:$0xff]
      %v434 = vld [vmem:[%s347 + $0x80] sm:$0xf]
      %v435 = vld [vmem:[%s347 + $0x84] sm:$0xff]
      %v436 = vld [vmem:[%s347 + $0x8c] sm:$0xf]
      %v437 = vld [vmem:[%s347 + $0x90] sm:$0xff]
      %v438 = vld [vmem:[%s347 + $0x98] sm:$0xf]
      %v439 = vld [vmem:[%s347 + $0x9c] sm:$0xff]
      %v440 = vld [vmem:[%s347 + $0xa4] sm:$0xf]
      %v441 = vunpack.c.l.bf16 %v413
      %v442 = vunpack.c.h.bf16 %v413
      %v443 = vunpack.c.l.bf16 %v414
      %v444 = vunpack.c.l.bf16 %v415
      %v445 = vunpack.c.h.bf16 %v415
      %v446 = vunpack.c.l.bf16 %v416
      %v447 = vunpack.c.l.bf16 %v417
      %v448 = vunpack.c.h.bf16 %v417
      %v449 = vunpack.c.l.bf16 %v418
      %v450 = vunpack.c.l.bf16 %v419
      %v451 = vunpack.c.h.bf16 %v419
      %v452 = vunpack.c.l.bf16 %v420
      %v453 = vunpack.c.l.bf16 %v421
      %v454 = vunpack.c.h.bf16 %v421
      %v455 = vunpack.c.l.bf16 %v422
      %v456 = vunpack.c.l.bf16 %v423
      %v457 = vunpack.c.h.bf16 %v423
      %v458 = vunpack.c.l.bf16 %v424
      %v459 = vunpack.c.l.bf16 %v425
      %v460 = vunpack.c.h.bf16 %v425
      %v461 = vunpack.c.l.bf16 %v426
      %v462 = vunpack.c.l.bf16 %v427
      %v463 = vunpack.c.h.bf16 %v427
      %v464 = vunpack.c.l.bf16 %v428
      %v465 = vunpack.c.l.bf16 %v429
      %v466 = vunpack.c.h.bf16 %v429
      %v467 = vunpack.c.l.bf16 %v430
      %v468 = vunpack.c.l.bf16 %v431
      %v469 = vunpack.c.h.bf16 %v431
      %v470 = vunpack.c.l.bf16 %v432
      %v471 = vunpack.c.l.bf16 %v433
      %v472 = vunpack.c.h.bf16 %v433
      %v473 = vunpack.c.l.bf16 %v434
      %v474 = vunpack.c.l.bf16 %v435
      %v475 = vunpack.c.h.bf16 %v435
      %v476 = vunpack.c.l.bf16 %v436
      %v477 = vunpack.c.l.bf16 %v437
      %v478 = vunpack.c.h.bf16 %v437
      %v479 = vunpack.c.l.bf16 %v438
      %v480 = vunpack.c.l.bf16 %v439
      %v481 = vunpack.c.h.bf16 %v439
      %v482 = vunpack.c.l.bf16 %v440
      %s483 = smul.u32 %s24, 3
      %s484 = scalar_lea.vmem %s1, %s483
      %v485 = vld [vmem:[%s484] sm:$0x7]
      %v487 = vperm.slane %v485, 0
      %v488 = vperm.slane %v485, 1
      %v489 = vperm.slane %v485, 2
      %v493 = vmul.f32 %v441, %v487
      %v494 = vmul.f32 %v442, %v488
      %v495 = vmul.f32 %v443, %v489
      %v496 = vmul.f32 %v444, %v487
      %v497 = vmul.f32 %v445, %v488
      %v498 = vmul.f32 %v446, %v489
      %v499 = vmul.f32 %v447, %v487
      %v500 = vmul.f32 %v448, %v488
      %v501 = vmul.f32 %v449, %v489
      %v502 = vmul.f32 %v450, %v487
      %v503 = vmul.f32 %v451, %v488
      %v504 = vmul.f32 %v452, %v489
      %v505 = vmul.f32 %v453, %v487
      %v506 = vmul.f32 %v454, %v488
      %v507 = vmul.f32 %v455, %v489
      %v508 = vmul.f32 %v456, %v487
      %v509 = vmul.f32 %v457, %v488
      %v510 = vmul.f32 %v458, %v489
      %v511 = vmul.f32 %v459, %v487
      %v512 = vmul.f32 %v460, %v488
      %v513 = vmul.f32 %v461, %v489
      %v514 = vmul.f32 %v462, %v487
      %v515 = vmul.f32 %v463, %v488
      %v516 = vmul.f32 %v464, %v489
      %v517 = vmul.f32 %v465, %v487
      %v518 = vmul.f32 %v466, %v488
      %v519 = vmul.f32 %v467, %v489
      %v520 = vmul.f32 %v468, %v487
      %v521 = vmul.f32 %v469, %v488
      %v522 = vmul.f32 %v470, %v489
      %v523 = vmul.f32 %v471, %v487
      %v524 = vmul.f32 %v472, %v488
      %v525 = vmul.f32 %v473, %v489
      %v526 = vmul.f32 %v474, %v487
      %v527 = vmul.f32 %v475, %v488
      %v528 = vmul.f32 %v476, %v489
      %v529 = vmul.f32 %v477, %v487
      %v530 = vmul.f32 %v478, %v488
      %v531 = vmul.f32 %v479, %v489
      %v532 = vmul.f32 %v480, %v487
      %v533 = vmul.f32 %v481, %v488
      %v534 = vmul.f32 %v482, %v489
      %v535 = vpack.c.bf16 %v496, %v493
      %v536 = vpack.c.bf16 %v497, %v494
      %v537 = vpack.c.bf16 %v498, %v495
      %v538 = vpack.c.bf16 %v502, %v499
      %v539 = vpack.c.bf16 %v503, %v500
      %v540 = vpack.c.bf16 %v504, %v501
      %v541 = vpack.c.bf16 %v508, %v505
      %v542 = vpack.c.bf16 %v509, %v506
      %v543 = vpack.c.bf16 %v510, %v507
      %v544 = vpack.c.bf16 %v514, %v511
      %v545 = vpack.c.bf16 %v515, %v512
      %v546 = vpack.c.bf16 %v516, %v513
      %v547 = vpack.c.bf16 %v520, %v517
      %v548 = vpack.c.bf16 %v521, %v518
      %v549 = vpack.c.bf16 %v522, %v519
      %v550 = vpack.c.bf16 %v526, %v523
      %v551 = vpack.c.bf16 %v527, %v524
      %v552 = vpack.c.bf16 %v528, %v525
      %v553 = vpack.c.bf16 %v532, %v529
      %v554 = vpack.c.bf16 %v533, %v530
      %v555 = vpack.c.bf16 %v534, %v531
      %v556 = vld [vmem:[#allocation2] sm:$0xff]
      %v557 = vld [vmem:[#allocation2 + $0x8] sm:$0xff]
      %v558 = vld [vmem:[#allocation2 + $0x10] sm:$0xff]
      %v559 = vld [vmem:[#allocation2 + $0x18] sm:$0xff]
      %v560 = vld [vmem:[#allocation2 + $0x20] sm:$0xff]
      %v561 = vld [vmem:[#allocation2 + $0x28] sm:$0xff]
      %v562 = vld [vmem:[#allocation2 + $0x30] sm:$0xff]
      %v563 = vld [vmem:[#allocation2 + $0x38] sm:$0xff]
      %v564 = vld [vmem:[#allocation2 + $0x40] sm:$0xff]
      %v565 = vld [vmem:[#allocation2 + $0x48] sm:$0xff]
      %v566 = vld [vmem:[#allocation2 + $0x50] sm:$0xff]
      %v567 = vld [vmem:[#allocation2 + $0x58] sm:$0xff]
      %v568 = vld [vmem:[#allocation2 + $0x60] sm:$0xff]
      %v569 = vld [vmem:[#allocation2 + $0x68] sm:$0xff]
      %v570 = vld [vmem:[#allocation2 + $0x70] sm:$0xff]
      %v571 = vld [vmem:[#allocation2 + $0x78] sm:$0xff]
      %v572 = vld [vmem:[#allocation2 + $0x80] sm:$0xff]
      %v573 = vld [vmem:[#allocation2 + $0x88] sm:$0xff]
      %v574 = vld [vmem:[#allocation2 + $0x90] sm:$0xff]
      %v575 = vld [vmem:[#allocation2 + $0x98] sm:$0xff]
      %v576 = vld [vmem:[#allocation2 + $0xa0] sm:$0xff]
      %v577 = vld [vmem:[#allocation2 + $0xa8] sm:$0xff]
      %v578 = vld [vmem:[#allocation2 + $0xb0] sm:$0xff]
      %v579 = vld [vmem:[#allocation2 + $0xb8] sm:$0xff]
      %v580 = vld [vmem:[#allocation2 + $0xc0] sm:$0xff]
      %v581 = vld [vmem:[#allocation2 + $0xc8] sm:$0xff]
      %v582 = vld [vmem:[#allocation2 + $0xd0] sm:$0xff]
      %v583 = vld [vmem:[#allocation2 + $0xd8] sm:$0xff]
      %s584 = smul.u32 %s24, 84
      %s585 = smul.addr %s584, 4
      %s586 = scalar_lea.vmem %s0, %s585
      %v587 = vld [vmem:[%s586] sm:$0xff]
      %v588 = vld [vmem:[%s586 + $0x8] sm:$0xff]
      %v589 = vld [vmem:[%s586 + $0x10] sm:$0xff]
      %v590 = vld [vmem:[%s586 + $0x18] sm:$0xff]
      %v591 = vld [vmem:[%s586 + $0x20] sm:$0xff]
      %v592 = vld [vmem:[%s586 + $0x28] sm:$0xff]
      %v593 = vld [vmem:[%s586 + $0x30] sm:$0xff]
      %v594 = vld [vmem:[%s586 + $0x38] sm:$0xff]
      %v595 = vld [vmem:[%s586 + $0x40] sm:$0xff]
      %v596 = vld [vmem:[%s586 + $0x48] sm:$0xff]
      %v597 = vld [vmem:[%s586 + $0x50] sm:$0xff]
      %v598 = vld [vmem:[%s586 + $0x58] sm:$0xff]
      %v599 = vld [vmem:[%s586 + $0x60] sm:$0xff]
      %v600 = vld [vmem:[%s586 + $0x68] sm:$0xff]
      %v601 = vld [vmem:[%s586 + $0x70] sm:$0xff]
      %v602 = vld [vmem:[%s586 + $0x78] sm:$0xff]
      %v603 = vld [vmem:[%s586 + $0x80] sm:$0xff]
      %v604 = vld [vmem:[%s586 + $0x88] sm:$0xff]
      %v605 = vld [vmem:[%s586 + $0x90] sm:$0xff]
      %v606 = vld [vmem:[%s586 + $0x98] sm:$0xff]
      %v607 = vld [vmem:[%s586 + $0xa0] sm:$0xff]
      %v608 = vld [vmem:[%s586 + $0xa8] sm:$0xff]
      %v609 = vld [vmem:[%s586 + $0xb0] sm:$0xff]
      %v610 = vld [vmem:[%s586 + $0xb8] sm:$0xff]
      %v611 = vld [vmem:[%s586 + $0xc0] sm:$0xff]
      %v612 = vld [vmem:[%s586 + $0xc8] sm:$0xff]
      %v613 = vld [vmem:[%s586 + $0xd0] sm:$0xff]
      %v614 = vld [vmem:[%s586 + $0xd8] sm:$0xff]
      %v615 = vld [vmem:[%s586 + $0xe0] sm:$0xff]
      %v616 = vld [vmem:[%s586 + $0xe8] sm:$0xff]
      %v617 = vld [vmem:[%s586 + $0xf0] sm:$0xff]
      %v618 = vld [vmem:[%s586 + $0xf8] sm:$0xff]
      %v619 = vld [vmem:[%s586 + $0x100] sm:$0xff]
      %v620 = vld [vmem:[%s586 + $0x108] sm:$0xff]
      %v621 = vld [vmem:[%s586 + $0x110] sm:$0xff]
      %v622 = vld [vmem:[%s586 + $0x118] sm:$0xff]
      %v623 = vld [vmem:[%s586 + $0x120] sm:$0xff]
      %v624 = vld [vmem:[%s586 + $0x128] sm:$0xff]
      %v625 = vld [vmem:[%s586 + $0x130] sm:$0xff]
      %v626 = vld [vmem:[%s586 + $0x138] sm:$0xff]
      %v627 = vld [vmem:[%s586 + $0x140] sm:$0xff]
      %v628 = vld [vmem:[%s586 + $0x148] sm:$0xff]
      %v671 = vunpack.c.l.b16 %v587
      %v672 = vunpack.c.h.b16 %v587
      %v673 = vunpack.c.l.b16 %v588
      %v674 = vunpack.c.h.b16 %v588
      %v675 = vunpack.c.l.b16 %v589
      %v676 = vunpack.c.h.b16 %v589
      %v677 = vunpack.c.l.b16 %v590
      %v678 = vunpack.c.h.b16 %v590
      %v679 = vunpack.c.l.b16 %v591
      %v680 = vunpack.c.h.b16 %v591
      %v681 = vunpack.c.l.b16 %v592
      %v682 = vunpack.c.h.b16 %v592
      %v683 = vunpack.c.l.b16 %v593
      %v684 = vunpack.c.h.b16 %v593
      %v685 = vunpack.c.l.b16 %v594
      %v686 = vunpack.c.h.b16 %v594
      %v687 = vunpack.c.l.b16 %v595
      %v688 = vunpack.c.h.b16 %v595
      %v689 = vunpack.c.l.b16 %v596
      %v690 = vunpack.c.h.b16 %v596
      %v691 = vunpack.c.l.b16 %v597
      %v692 = vunpack.c.h.b16 %v597
      %v693 = vunpack.c.l.b16 %v598
      %v694 = vunpack.c.h.b16 %v598
      %v695 = vunpack.c.l.b16 %v599
      %v696 = vunpack.c.h.b16 %v599
      %v697 = vunpack.c.l.b16 %v600
      %v698 = vunpack.c.h.b16 %v600
      %v699 = vunpack.c.l.b16 %v601
      %v700 = vunpack.c.h.b16 %v601
      %v701 = vunpack.c.l.b16 %v602
      %v702 = vunpack.c.h.b16 %v602
      %v703 = vunpack.c.l.b16 %v603
      %v704 = vunpack.c.h.b16 %v603
      %v705 = vunpack.c.l.b16 %v604
      %v706 = vunpack.c.h.b16 %v604
      %v707 = vunpack.c.l.b16 %v605
      %v708 = vunpack.c.h.b16 %v605
      %v709 = vunpack.c.l.b16 %v606
      %v710 = vunpack.c.h.b16 %v606
      %v711 = vunpack.c.l.b16 %v607
      %v712 = vunpack.c.h.b16 %v607
      %v713 = vunpack.c.l.b16 %v608
      %v714 = vunpack.c.h.b16 %v608
      %v715 = vunpack.c.l.b16 %v609
      %v716 = vunpack.c.h.b16 %v609
      %v717 = vunpack.c.l.b16 %v610
      %v718 = vunpack.c.h.b16 %v610
      %v719 = vunpack.c.l.b16 %v611
      %v720 = vunpack.c.h.b16 %v611
      %v721 = vunpack.c.l.b16 %v612
      %v722 = vunpack.c.h.b16 %v612
      %v723 = vunpack.c.l.b16 %v613
      %v724 = vunpack.c.h.b16 %v613
      %v725 = vunpack.c.l.b16 %v614
      %v726 = vunpack.c.h.b16 %v614
      %v727 = vunpack.c.l.b16 %v615
      %v728 = vunpack.c.h.b16 %v615
      %v729 = vunpack.c.l.b16 %v616
      %v730 = vunpack.c.h.b16 %v616
      %v731 = vunpack.c.l.b16 %v617
      %v732 = vunpack.c.h.b16 %v617
      %v733 = vunpack.c.l.b16 %v618
      %v734 = vunpack.c.h.b16 %v618
      %v735 = vunpack.c.l.b16 %v619
      %v736 = vunpack.c.h.b16 %v619
      %v737 = vunpack.c.l.b16 %v620
      %v738 = vunpack.c.h.b16 %v620
      %v739 = vunpack.c.l.b16 %v621
      %v740 = vunpack.c.h.b16 %v621
      %v741 = vunpack.c.l.b16 %v622
      %v742 = vunpack.c.h.b16 %v622
      %v743 = vunpack.c.l.b16 %v623
      %v744 = vunpack.c.h.b16 %v623
      %v745 = vunpack.c.l.b16 %v624
      %v746 = vunpack.c.h.b16 %v624
      %v747 = vunpack.c.l.b16 %v625
      %v748 = vunpack.c.h.b16 %v625
      %v749 = vunpack.c.l.b16 %v626
      %v750 = vunpack.c.h.b16 %v626
      %v751 = vunpack.c.l.b16 %v627
      %v752 = vunpack.c.h.b16 %v627
      %v753 = vunpack.c.l.b16 %v628
      %v754 = vunpack.c.h.b16 %v628
      %v755 = vpack.c.b16 %v673, %v671
      %v756 = vpack.c.b16 %v674, %v672
      %v757 = vpack.c.b16 %v677, %v675
      %v758 = vpack.c.b16 %v678, %v676
      %v759 = vpack.c.b16 %v681, %v679
      %v760 = vpack.c.b16 %v682, %v680
      %v761 = vpack.c.b16 %v685, %v683
      %v762 = vpack.c.b16 %v686, %v684
      %v763 = vpack.c.b16 %v689, %v687
      %v764 = vpack.c.b16 %v690, %v688
      %v765 = vpack.c.b16 %v693, %v691
      %v766 = vpack.c.b16 %v694, %v692
      %v767 = vpack.c.b16 %v697, %v695
      %v768 = vpack.c.b16 %v698, %v696
      %v769 = vpack.c.b16 %v701, %v699
      %v770 = vpack.c.b16 %v702, %v700
      %v771 = vpack.c.b16 %v705, %v703
      %v772 = vpack.c.b16 %v706, %v704
      %v773 = vpack.c.b16 %v709, %v707
      %v774 = vpack.c.b16 %v710, %v708
      %v775 = vpack.c.b16 %v713, %v711
      %v776 = vpack.c.b16 %v714, %v712
      %v777 = vpack.c.b16 %v717, %v715
      %v778 = vpack.c.b16 %v718, %v716
      %v779 = vpack.c.b16 %v721, %v719
      %v780 = vpack.c.b16 %v722, %v720
      %v781 = vpack.c.b16 %v725, %v723
      %v782 = vpack.c.b16 %v726, %v724
      %v783 = vpack.c.b16 %v729, %v727
      %v784 = vpack.c.b16 %v730, %v728
      %v785 = vpack.c.b16 %v733, %v731
      %v786 = vpack.c.b16 %v734, %v732
      %v787 = vpack.c.b16 %v737, %v735
      %v788 = vpack.c.b16 %v738, %v736
      %v789 = vpack.c.b16 %v741, %v739
      %v790 = vpack.c.b16 %v742, %v740
      %v791 = vpack.c.b16 %v745, %v743
      %v792 = vpack.c.b16 %v746, %v744
      %v793 = vpack.c.b16 %v749, %v747
      %v794 = vpack.c.b16 %v750, %v748
      %v795 = vpack.c.b16 %v753, %v751
      %v796 = vpack.c.b16 %v754, %v752
      %vm839 = vcmask 654336
      %v841 = vsel %vm839, %v537, 0
      %v844 = vsel %vm839, %v540, 0
      %v847 = vsel %vm839, %v543, 0
      %v850 = vsel %vm839, %v546, 0
      %v853 = vsel %vm839, %v549, 0
      %v856 = vsel %vm839, %v552, 0
      %v859 = vsel %vm839, %v555, 0
      %861 = vmatpush.bf16.msra.mxu0 %v769
      %862 = vmatpush.bf16.msra.mxu0 %v767
      %863 = vmatpush.bf16.msra.mxu0 %v765
      %864 = vmatpush.bf16.msra.mxu0 %v763
      %865 = vmatpush.bf16.msra.mxu0 %v761
      %866 = vmatpush.bf16.msra.mxu0 %v759
      %867 = vmatpush.bf16.msra.mxu0 %v757
      %868 = vmatpush.bf16.msra.mxu0 %v755
      %869 = vmatmul.bf16.gmra.mxu0 %v535
      %v870 = vpop.f32.mrf.mxu0
      %v871 = vadd.f32 0.0, %v870
      %v872 = vpop.f32.mrf.mxu0
      %v873 = vadd.f32 0.0, %v872
      %874 = vmatmul.bf16.gmra.mxu0 %v538
      %v875 = vpop.f32.mrf.mxu0
      %v876 = vadd.f32 0.0, %v875
      %v877 = vpop.f32.mrf.mxu0
      %v878 = vadd.f32 0.0, %v877
      %879 = vmatmul.bf16.gmra.mxu0 %v541
      %v880 = vpop.f32.mrf.mxu0
      %v881 = vadd.f32 0.0, %v880
      %v882 = vpop.f32.mrf.mxu0
      %v883 = vadd.f32 0.0, %v882
      %884 = vmatmul.bf16.gmra.mxu0 %v544
      %v885 = vpop.f32.mrf.mxu0
      %v886 = vadd.f32 0.0, %v885
      %v887 = vpop.f32.mrf.mxu0
      %v888 = vadd.f32 0.0, %v887
      %889 = vmatmul.bf16.gmra.mxu0 %v547
      %v890 = vpop.f32.mrf.mxu0
      %v891 = vadd.f32 0.0, %v890
      %v892 = vpop.f32.mrf.mxu0
      %v893 = vadd.f32 0.0, %v892
      %894 = vmatmul.bf16.gmra.mxu0 %v550
      %v895 = vpop.f32.mrf.mxu0
      %v896 = vadd.f32 0.0, %v895
      %v897 = vpop.f32.mrf.mxu0
      %v898 = vadd.f32 0.0, %v897
      %899 = vmatmul.bf16.gmra.mxu0 %v553
      %v900 = vpop.f32.mrf.mxu0
      %v901 = vadd.f32 0.0, %v900
      %v902 = vpop.f32.mrf.mxu0
      %v903 = vadd.f32 0.0, %v902
      %904 = vdwg.mxu0
      %905 = vmatpush.bf16.msra.mxu0 %v785
      %906 = vmatpush.bf16.msra.mxu0 %v783
      %907 = vmatpush.bf16.msra.mxu0 %v781
      %908 = vmatpush.bf16.msra.mxu0 %v779
      %909 = vmatpush.bf16.msra.mxu0 %v777
      %910 = vmatpush.bf16.msra.mxu0 %v775
      %911 = vmatpush.bf16.msra.mxu0 %v773
      %912 = vmatpush.bf16.msra.mxu0 %v771
      %913 = vmatmul.bf16.gmra.mxu0 %v536
      %v914 = vpop.f32.mrf.mxu0
      %v915 = vadd.f32 %v871, %v914
      %v916 = vpop.f32.mrf.mxu0
      %v917 = vadd.f32 %v873, %v916
      %918 = vmatmul.bf16.gmra.mxu0 %v539
      %v919 = vpop.f32.mrf.mxu0
      %v920 = vadd.f32 %v876, %v919
      %v921 = vpop.f32.mrf.mxu0
      %v922 = vadd.f32 %v878, %v921
      %923 = vmatmul.bf16.gmra.mxu0 %v542
      %v924 = vpop.f32.mrf.mxu0
      %v925 = vadd.f32 %v881, %v924
      %v926 = vpop.f32.mrf.mxu0
      %v927 = vadd.f32 %v883, %v926
      %928 = vmatmul.bf16.gmra.mxu0 %v545
      %v929 = vpop.f32.mrf.mxu0
      %v930 = vadd.f32 %v886, %v929
      %v931 = vpop.f32.mrf.mxu0
      %v932 = vadd.f32 %v888, %v931
      %933 = vmatmul.bf16.gmra.mxu0 %v548
      %v934 = vpop.f32.mrf.mxu0
      %v935 = vadd.f32 %v891, %v934
      %v936 = vpop.f32.mrf.mxu0
      %v937 = vadd.f32 %v893, %v936
      %938 = vmatmul.bf16.gmra.mxu0 %v551
      %v939 = vpop.f32.mrf.mxu0
      %v940 = vadd.f32 %v896, %v939
      %v941 = vpop.f32.mrf.mxu0
      %v942 = vadd.f32 %v898, %v941
      %943 = vmatmul.bf16.gmra.mxu0 %v554
      %v944 = vpop.f32.mrf.mxu0
      %v945 = vadd.f32 %v901, %v944
      %v946 = vpop.f32.mrf.mxu0
      %v947 = vadd.f32 %v903, %v946
      %948 = vdwg.mxu0
      %949 = vmatpush.bf16.msra.mxu0 0
      %950 = vmatpush.bf16.msra.mxu0 0
      %951 = vmatpush.bf16.msra.mxu0 0
      %952 = vmatpush.bf16.msra.mxu0 %v795
      %953 = vmatpush.bf16.msra.mxu0 %v793
      %954 = vmatpush.bf16.msra.mxu0 %v791
      %955 = vmatpush.bf16.msra.mxu0 %v789
      %956 = vmatpush.bf16.msra.mxu0 %v787
      %957 = vmatmul.bf16.gmra.mxu0 %v841
      %v958 = vpop.f32.mrf.mxu0
      %v959 = vadd.f32 %v915, %v958
      %v960 = vpop.f32.mrf.mxu0
      %v961 = vadd.f32 %v917, %v960
      %962 = vmatmul.bf16.gmra.mxu0 %v844
      %v963 = vpop.f32.mrf.mxu0
      %v964 = vadd.f32 %v920, %v963
      %v965 = vpop.f32.mrf.mxu0
      %v966 = vadd.f32 %v922, %v965
      %967 = vmatmul.bf16.gmra.mxu0 %v847
      %v968 = vpop.f32.mrf.mxu0
      %v969 = vadd.f32 %v925, %v968
      %v970 = vpop.f32.mrf.mxu0
      %v971 = vadd.f32 %v927, %v970
      %972 = vmatmul.bf16.gmra.mxu0 %v850
      %v973 = vpop.f32.mrf.mxu0
      %v974 = vadd.f32 %v930, %v973
      %v975 = vpop.f32.mrf.mxu0
      %v976 = vadd.f32 %v932, %v975
      %977 = vmatmul.bf16.gmra.mxu0 %v853
      %v978 = vpop.f32.mrf.mxu0
      %v979 = vadd.f32 %v935, %v978
      %v980 = vpop.f32.mrf.mxu0
      %v981 = vadd.f32 %v937, %v980
      %982 = vmatmul.bf16.gmra.mxu0 %v856
      %v983 = vpop.f32.mrf.mxu0
      %v984 = vadd.f32 %v940, %v983
      %v985 = vpop.f32.mrf.mxu0
      %v986 = vadd.f32 %v942, %v985
      %987 = vmatmul.bf16.gmra.mxu0 %v859
      %v988 = vpop.f32.mrf.mxu0
      %v989 = vadd.f32 %v945, %v988
      %v990 = vpop.f32.mrf.mxu0
      %v991 = vadd.f32 %v947, %v990
      %992 = vdwg.mxu0
      %993 = vmatpush.bf16.msra.mxu0 %v770
      %994 = vmatpush.bf16.msra.mxu0 %v768
      %995 = vmatpush.bf16.msra.mxu0 %v766
      %996 = vmatpush.bf16.msra.mxu0 %v764
      %997 = vmatpush.bf16.msra.mxu0 %v762
      %998 = vmatpush.bf16.msra.mxu0 %v760
      %999 = vmatpush.bf16.msra.mxu0 %v758
      %1000 = vmatpush.bf16.msra.mxu0 %v756
      %1001 = vmatmul.bf16.gmra.mxu0 %v535
      %v1002 = vpop.f32.mrf.mxu0
      %v1003 = vadd.f32 0.0, %v1002
      %v1004 = vpop.f32.mrf.mxu0
      %v1005 = vadd.f32 0.0, %v1004
      %1006 = vmatmul.bf16.gmra.mxu0 %v538
      %v1007 = vpop.f32.mrf.mxu0
      %v1008 = vadd.f32 0.0, %v1007
      %v1009 = vpop.f32.mrf.mxu0
      %v1010 = vadd.f32 0.0, %v1009
      %1011 = vmatmul.bf16.gmra.mxu0 %v541
      %v1012 = vpop.f32.mrf.mxu0
      %v1013 = vadd.f32 0.0, %v1012
      %v1014 = vpop.f32.mrf.mxu0
      %v1015 = vadd.f32 0.0, %v1014
      %1016 = vmatmul.bf16.gmra.mxu0 %v544
      %v1017 = vpop.f32.mrf.mxu0
      %v1018 = vadd.f32 0.0, %v1017
      %v1019 = vpop.f32.mrf.mxu0
      %v1020 = vadd.f32 0.0, %v1019
      %1021 = vmatmul.bf16.gmra.mxu0 %v547
      %v1022 = vpop.f32.mrf.mxu0
      %v1023 = vadd.f32 0.0, %v1022
      %v1024 = vpop.f32.mrf.mxu0
      %v1025 = vadd.f32 0.0, %v1024
      %1026 = vmatmul.bf16.gmra.mxu0 %v550
      %v1027 = vpop.f32.mrf.mxu0
      %v1028 = vadd.f32 0.0, %v1027
      %v1029 = vpop.f32.mrf.mxu0
      %v1030 = vadd.f32 0.0, %v1029
      %1031 = vmatmul.bf16.gmra.mxu0 %v553
      %v1032 = vpop.f32.mrf.mxu0
      %v1033 = vadd.f32 0.0, %v1032
      %v1034 = vpop.f32.mrf.mxu0
      %v1035 = vadd.f32 0.0, %v1034
      %1036 = vdwg.mxu0
      %1037 = vmatpush.bf16.msra.mxu0 %v786
      %1038 = vmatpush.bf16.msra.mxu0 %v784
      %1039 = vmatpush.bf16.msra.mxu0 %v782
      %1040 = vmatpush.bf16.msra.mxu0 %v780
      %1041 = vmatpush.bf16.msra.mxu0 %v778
      %1042 = vmatpush.bf16.msra.mxu0 %v776
      %1043 = vmatpush.bf16.msra.mxu0 %v774
      %1044 = vmatpush.bf16.msra.mxu0 %v772
      %1045 = vmatmul.bf16.gmra.mxu0 %v536
      %v1046 = vpop.f32.mrf.mxu0
      %v1047 = vadd.f32 %v1003, %v1046
      %v1048 = vpop.f32.mrf.mxu0
      %v1049 = vadd.f32 %v1005, %v1048
      %1050 = vmatmul.bf16.gmra.mxu0 %v539
      %v1051 = vpop.f32.mrf.mxu0
      %v1052 = vadd.f32 %v1008, %v1051
      %v1053 = vpop.f32.mrf.mxu0
      %v1054 = vadd.f32 %v1010, %v1053
      %1055 = vmatmul.bf16.gmra.mxu0 %v542
      %v1056 = vpop.f32.mrf.mxu0
      %v1057 = vadd.f32 %v1013, %v1056
      %v1058 = vpop.f32.mrf.mxu0
      %v1059 = vadd.f32 %v1015, %v1058
      %1060 = vmatmul.bf16.gmra.mxu0 %v545
      %v1061 = vpop.f32.mrf.mxu0
      %v1062 = vadd.f32 %v1018, %v1061
      %v1063 = vpop.f32.mrf.mxu0
      %v1064 = vadd.f32 %v1020, %v1063
      %1065 = vmatmul.bf16.gmra.mxu0 %v548
      %v1066 = vpop.f32.mrf.mxu0
      %v1067 = vadd.f32 %v1023, %v1066
      %v1068 = vpop.f32.mrf.mxu0
      %v1069 = vadd.f32 %v1025, %v1068
      %1070 = vmatmul.bf16.gmra.mxu0 %v551
      %v1071 = vpop.f32.mrf.mxu0
      %v1072 = vadd.f32 %v1028, %v1071
      %v1073 = vpop.f32.mrf.mxu0
      %v1074 = vadd.f32 %v1030, %v1073
      %1075 = vmatmul.bf16.gmra.mxu0 %v554
      %v1076 = vpop.f32.mrf.mxu0
      %v1077 = vadd.f32 %v1033, %v1076
      %v1078 = vpop.f32.mrf.mxu0
      %v1079 = vadd.f32 %v1035, %v1078
      %1080 = vdwg.mxu0
      %1081 = vmatpush.bf16.msra.mxu0 0
      %1082 = vmatpush.bf16.msra.mxu0 0
      %1083 = vmatpush.bf16.msra.mxu0 0
      %1084 = vmatpush.bf16.msra.mxu0 %v796
      %1085 = vmatpush.bf16.msra.mxu0 %v794
      %1086 = vmatpush.bf16.msra.mxu0 %v792
      %1087 = vmatpush.bf16.msra.mxu0 %v790
      %1088 = vmatpush.bf16.msra.mxu0 %v788
      %1089 = vmatmul.bf16.gmra.mxu0 %v841
      %v1090 = vpop.f32.mrf.mxu0
      %v1091 = vadd.f32 %v1047, %v1090
      %v1092 = vpop.f32.mrf.mxu0
      %v1093 = vadd.f32 %v1049, %v1092
      %1094 = vmatmul.bf16.gmra.mxu0 %v844
      %v1095 = vpop.f32.mrf.mxu0
      %v1096 = vadd.f32 %v1052, %v1095
      %v1097 = vpop.f32.mrf.mxu0
      %v1098 = vadd.f32 %v1054, %v1097
      %1099 = vmatmul.bf16.gmra.mxu0 %v847
      %v1100 = vpop.f32.mrf.mxu0
      %v1101 = vadd.f32 %v1057, %v1100
      %v1102 = vpop.f32.mrf.mxu0
      %v1103 = vadd.f32 %v1059, %v1102
      %1104 = vmatmul.bf16.gmra.mxu0 %v850
      %v1105 = vpop.f32.mrf.mxu0
      %v1106 = vadd.f32 %v1062, %v1105
      %v1107 = vpop.f32.mrf.mxu0
      %v1108 = vadd.f32 %v1064, %v1107
      %1109 = vmatmul.bf16.gmra.mxu0 %v853
      %v1110 = vpop.f32.mrf.mxu0
      %v1111 = vadd.f32 %v1067, %v1110
      %v1112 = vpop.f32.mrf.mxu0
      %v1113 = vadd.f32 %v1069, %v1112
      %1114 = vmatmul.bf16.gmra.mxu0 %v856
      %v1115 = vpop.f32.mrf.mxu0
      %v1116 = vadd.f32 %v1072, %v1115
      %v1117 = vpop.f32.mrf.mxu0
      %v1118 = vadd.f32 %v1074, %v1117
      %1119 = vmatmul.bf16.gmra.mxu0 %v859
      %v1120 = vpop.f32.mrf.mxu0
      %v1121 = vadd.f32 %v1077, %v1120
      %v1122 = vpop.f32.mrf.mxu0
      %v1123 = vadd.f32 %v1079, %v1122
      %1124 = vdwg.mxu0
      %v1125 = vadd.f32 %v556, %v959
      %v1126 = vadd.f32 %v557, %v1091
      %v1127 = vadd.f32 %v558, %v961
      %v1128 = vadd.f32 %v559, %v1093
      %v1129 = vadd.f32 %v560, %v964
      %v1130 = vadd.f32 %v561, %v1096
      %v1131 = vadd.f32 %v562, %v966
      %v1132 = vadd.f32 %v563, %v1098
      %v1133 = vadd.f32 %v564, %v969
      %v1134 = vadd.f32 %v565, %v1101
      %v1135 = vadd.f32 %v566, %v971
      %v1136 = vadd.f32 %v567, %v1103
      %v1137 = vadd.f32 %v568, %v974
      %v1138 = vadd.f32 %v569, %v1106
      %v1139 = vadd.f32 %v570, %v976
      %v1140 = vadd.f32 %v571, %v1108
      %v1141 = vadd.f32 %v572, %v979
      %v1142 = vadd.f32 %v573, %v1111
      %v1143 = vadd.f32 %v574, %v981
      %v1144 = vadd.f32 %v575, %v1113
      %v1145 = vadd.f32 %v576, %v984
      %v1146 = vadd.f32 %v577, %v1116
      %v1147 = vadd.f32 %v578, %v986
      %v1148 = vadd.f32 %v579, %v1118
      %v1149 = vadd.f32 %v580, %v989
      %v1150 = vadd.f32 %v581, %v1121
      %v1151 = vadd.f32 %v582, %v991
      %v1152 = vadd.f32 %v583, %v1123
      %1153 = vst [vmem:[#allocation2] sm:$0xff] %v1125
      %vm1154 = vcmask 556032
      %1155 = vst.msk [vmem:[#allocation2 + $0x8] sm:$0xff] %vm1154, %v1126
      %1156 = vst [vmem:[#allocation2 + $0x10] sm:$0xff] %v1127
      %1157 = vst.msk [vmem:[#allocation2 + $0x18] sm:$0xff] %vm1154, %v1128
      %1158 = vst [vmem:[#allocation2 + $0x20] sm:$0xff] %v1129
      %1159 = vst.msk [vmem:[#allocation2 + $0x28] sm:$0xff] %vm1154, %v1130
      %1160 = vst [vmem:[#allocation2 + $0x30] sm:$0xff] %v1131
      %1161 = vst.msk [vmem:[#allocation2 + $0x38] sm:$0xff] %vm1154, %v1132
      %1162 = vst [vmem:[#allocation2 + $0x40] sm:$0xff] %v1133
      %1163 = vst.msk [vmem:[#allocation2 + $0x48] sm:$0xff] %vm1154, %v1134
      %1164 = vst [vmem:[#allocation2 + $0x50] sm:$0xff] %v1135
      %1165 = vst.msk [vmem:[#allocation2 + $0x58] sm:$0xff] %vm1154, %v1136
      %1166 = vst [vmem:[#allocation2 + $0x60] sm:$0xff] %v1137
      %1167 = vst.msk [vmem:[#allocation2 + $0x68] sm:$0xff] %vm1154, %v1138
      %1168 = vst [vmem:[#allocation2 + $0x70] sm:$0xff] %v1139
      %1169 = vst.msk [vmem:[#allocation2 + $0x78] sm:$0xff] %vm1154, %v1140
      %1170 = vst [vmem:[#allocation2 + $0x80] sm:$0xff] %v1141
      %1171 = vst.msk [vmem:[#allocation2 + $0x88] sm:$0xff] %vm1154, %v1142
      %1172 = vst [vmem:[#allocation2 + $0x90] sm:$0xff] %v1143
      %1173 = vst.msk [vmem:[#allocation2 + $0x98] sm:$0xff] %vm1154, %v1144
      %1174 = vst [vmem:[#allocation2 + $0xa0] sm:$0xff] %v1145
      %1175 = vst.msk [vmem:[#allocation2 + $0xa8] sm:$0xff] %vm1154, %v1146
      %1176 = vst [vmem:[#allocation2 + $0xb0] sm:$0xff] %v1147
      %1177 = vst.msk [vmem:[#allocation2 + $0xb8] sm:$0xff] %vm1154, %v1148
      %1178 = vst [vmem:[#allocation2 + $0xc0] sm:$0xff] %v1149
      %1179 = vst.msk [vmem:[#allocation2 + $0xc8] sm:$0xff] %vm1154, %v1150
      %1180 = vst [vmem:[#allocation2 + $0xd0] sm:$0xff] %v1151
      %1181 = vst.msk [vmem:[#allocation2 + $0xd8] sm:$0xff] %vm1154, %v1152
      %p1182 = scmp.eq.s32.totalorder %s24, 1
      // Predicated region
      $region45: #{tpu_custom_call.1} parent=39 // pred_check
        %p1183 = pneg %p1182
      $region46: #{tpu_custom_call.1} parent=39 // pred_check_branch
        %1185 = sbr.rel (%p1183) target = $region48
      $region47: #{tpu_custom_call.1} parent=39 // pred_region
        %v1186 = vld [vmem:[#allocation2] sm:$0xff]
        %v1187 = vld [vmem:[#allocation2 + $0x8] sm:$0xff]
        %v1188 = vld [vmem:[#allocation2 + $0x10] sm:$0xff]
        %v1189 = vld [vmem:[#allocation2 + $0x18] sm:$0xff]
        %v1190 = vld [vmem:[#allocation2 + $0x20] sm:$0xff]
        %v1191 = vld [vmem:[#allocation2 + $0x28] sm:$0xff]
        %v1192 = vld [vmem:[#allocation2 + $0x30] sm:$0xff]
        %v1193 = vld [vmem:[#allocation2 + $0x38] sm:$0xff]
        %v1194 = vld [vmem:[#allocation2 + $0x40] sm:$0xff]
        %v1195 = vld [vmem:[#allocation2 + $0x48] sm:$0xff]
        %v1196 = vld [vmem:[#allocation2 + $0x50] sm:$0xff]
        %v1197 = vld [vmem:[#allocation2 + $0x58] sm:$0xff]
        %v1198 = vld [vmem:[#allocation2 + $0x60] sm:$0xff]
        %v1199 = vld [vmem:[#allocation2 + $0x68] sm:$0xff]
        %v1200 = vld [vmem:[#allocation2 + $0x70] sm:$0xff]
        %v1201 = vld [vmem:[#allocation2 + $0x78] sm:$0xff]
        %v1202 = vld [vmem:[#allocation2 + $0x80] sm:$0xff]
        %v1203 = vld [vmem:[#allocation2 + $0x88] sm:$0xff]
        %v1204 = vld [vmem:[#allocation2 + $0x90] sm:$0xff]
        %v1205 = vld [vmem:[#allocation2 + $0x98] sm:$0xff]
        %v1206 = vld [vmem:[#allocation2 + $0xa0] sm:$0xff]
        %v1207 = vld [vmem:[#allocation2 + $0xa8] sm:$0xff]
        %v1208 = vld [vmem:[#allocation2 + $0xb0] sm:$0xff]
        %v1209 = vld [vmem:[#allocation2 + $0xb8] sm:$0xff]
        %v1210 = vld [vmem:[#allocation2 + $0xc0] sm:$0xff]
        %v1211 = vld [vmem:[#allocation2 + $0xc8] sm:$0xff]
        %v1212 = vld [vmem:[#allocation2 + $0xd0] sm:$0xff]
        %v1213 = vld [vmem:[#allocation2 + $0xd8] sm:$0xff]
        %v1214 = vsel %vm1154, %v1187, 0.0
        %v1215 = vadd.f32 %v1186, %v1214
        %1216 = vadd.xlane.f32.xlu0 %v1215
        %v1217 = vpop.xlane.xlu0 %1216
        %v1218 = vsel %vm1154, %v1189, 0.0
        %v1219 = vadd.f32 %v1188, %v1218
        %1220 = vadd.xlane.f32.xlu0 %v1219
        %v1221 = vpop.xlane.xlu0 %1220
        %v1222 = vsel %vm1154, %v1191, 0.0
        %v1223 = vadd.f32 %v1190, %v1222
        %1224 = vadd.xlane.f32.xlu0 %v1223
        %v1225 = vpop.xlane.xlu0 %1224
        %v1226 = vsel %vm1154, %v1193, 0.0
        %v1227 = vadd.f32 %v1192, %v1226
        %1228 = vadd.xlane.f32.xlu0 %v1227
        %v1229 = vpop.xlane.xlu0 %1228
        %v1230 = vsel %vm1154, %v1195, 0.0
        %v1231 = vadd.f32 %v1194, %v1230
        %1232 = vadd.xlane.f32.xlu0 %v1231
        %v1233 = vpop.xlane.xlu0 %1232
        %v1234 = vsel %vm1154, %v1197, 0.0
        %v1235 = vadd.f32 %v1196, %v1234
        %1236 = vadd.xlane.f32.xlu0 %v1235
        %v1237 = vpop.xlane.xlu0 %1236
        %v1238 = vsel %vm1154, %v1199, 0.0
        %v1239 = vadd.f32 %v1198, %v1238
        %1240 = vadd.xlane.f32.xlu0 %v1239
        %v1241 = vpop.xlane.xlu0 %1240
        %v1242 = vsel %vm1154, %v1201, 0.0
        %v1243 = vadd.f32 %v1200, %v1242
        %1244 = vadd.xlane.f32.xlu0 %v1243
        %v1245 = vpop.xlane.xlu0 %1244
        %v1246 = vsel %vm1154, %v1203, 0.0
        %v1247 = vadd.f32 %v1202, %v1246
        %1248 = vadd.xlane.f32.xlu0 %v1247
        %v1249 = vpop.xlane.xlu0 %1248
        %v1250 = vsel %vm1154, %v1205, 0.0
        %v1251 = vadd.f32 %v1204, %v1250
        %1252 = vadd.xlane.f32.xlu0 %v1251
        %v1253 = vpop.xlane.xlu0 %1252
        %v1254 = vsel %vm1154, %v1207, 0.0
        %v1255 = vadd.f32 %v1206, %v1254
        %1256 = vadd.xlane.f32.xlu0 %v1255
        %v1257 = vpop.xlane.xlu0 %1256
        %v1258 = vsel %vm1154, %v1209, 0.0
        %v1259 = vadd.f32 %v1208, %v1258
        %1260 = vadd.xlane.f32.xlu0 %v1259
        %v1261 = vpop.xlane.xlu0 %1260
        %v1262 = vsel %vm1154, %v1211, 0.0
        %v1263 = vadd.f32 %v1210, %v1262
        %1264 = vadd.xlane.f32.xlu0 %v1263
        %v1265 = vpop.xlane.xlu0 %1264
        %v1266 = vsel %vm1154, %v1213, 0.0
        %v1267 = vadd.f32 %v1212, %v1266
        %1268 = vadd.xlane.f32.xlu0 %v1267
        %v1269 = vpop.xlane.xlu0 %1268
        %v1270 = vmul.f32 %v1217, 0.0051020407
        %v1271 = vmul.f32 %v1221, 0.0051020407
        %v1272 = vmul.f32 %v1225, 0.0051020407
        %v1273 = vmul.f32 %v1229, 0.0051020407
        %v1274 = vmul.f32 %v1233, 0.0051020407
        %v1275 = vmul.f32 %v1237, 0.0051020407
        %v1276 = vmul.f32 %v1241, 0.0051020407
        %v1277 = vmul.f32 %v1245, 0.0051020407
        %v1278 = vmul.f32 %v1249, 0.0051020407
        %v1279 = vmul.f32 %v1253, 0.0051020407
        %v1280 = vmul.f32 %v1257, 0.0051020407
        %v1281 = vmul.f32 %v1261, 0.0051020407
        %v1282 = vmul.f32 %v1265, 0.0051020407
        %v1283 = vmul.f32 %v1269, 0.0051020407
        %v1284 = vsub.f32 %v1186, %v1270
        %v1285 = vsub.f32 %v1187, %v1270
        %v1286 = vsub.f32 %v1188, %v1271
        %v1287 = vsub.f32 %v1189, %v1271
        %v1288 = vsub.f32 %v1190, %v1272
        %v1289 = vsub.f32 %v1191, %v1272
        %v1290 = vsub.f32 %v1192, %v1273
        %v1291 = vsub.f32 %v1193, %v1273
        %v1292 = vsub.f32 %v1194, %v1274
        %v1293 = vsub.f32 %v1195, %v1274
        %v1294 = vsub.f32 %v1196, %v1275
        %v1295 = vsub.f32 %v1197, %v1275
        %v1296 = vsub.f32 %v1198, %v1276
        %v1297 = vsub.f32 %v1199, %v1276
        %v1298 = vsub.f32 %v1200, %v1277
        %v1299 = vsub.f32 %v1201, %v1277
        %v1300 = vsub.f32 %v1202, %v1278
        %v1301 = vsub.f32 %v1203, %v1278
        %v1302 = vsub.f32 %v1204, %v1279
        %v1303 = vsub.f32 %v1205, %v1279
        %v1304 = vsub.f32 %v1206, %v1280
        %v1305 = vsub.f32 %v1207, %v1280
        %v1306 = vsub.f32 %v1208, %v1281
        %v1307 = vsub.f32 %v1209, %v1281
        %v1308 = vsub.f32 %v1210, %v1282
        %v1309 = vsub.f32 %v1211, %v1282
        %v1310 = vsub.f32 %v1212, %v1283
        %v1311 = vsub.f32 %v1213, %v1283
        %v1312 = vmul.f32 %v1284, %v1284
        %v1313 = vmul.f32 %v1285, %v1285
        %v1314 = vmul.f32 %v1286, %v1286
        %v1315 = vmul.f32 %v1287, %v1287
        %v1316 = vmul.f32 %v1288, %v1288
        %v1317 = vmul.f32 %v1289, %v1289
        %v1318 = vmul.f32 %v1290, %v1290
        %v1319 = vmul.f32 %v1291, %v1291
        %v1320 = vmul.f32 %v1292, %v1292
        %v1321 = vmul.f32 %v1293, %v1293
        %v1322 = vmul.f32 %v1294, %v1294
        %v1323 = vmul.f32 %v1295, %v1295
        %v1324 = vmul.f32 %v1296, %v1296
        %v1325 = vmul.f32 %v1297, %v1297
        %v1326 = vmul.f32 %v1298, %v1298
        %v1327 = vmul.f32 %v1299, %v1299
        %v1328 = vmul.f32 %v1300, %v1300
        %v1329 = vmul.f32 %v1301, %v1301
        %v1330 = vmul.f32 %v1302, %v1302
        %v1331 = vmul.f32 %v1303, %v1303
        %v1332 = vmul.f32 %v1304, %v1304
        %v1333 = vmul.f32 %v1305, %v1305
        %v1334 = vmul.f32 %v1306, %v1306
        %v1335 = vmul.f32 %v1307, %v1307
        %v1336 = vmul.f32 %v1308, %v1308
        %v1337 = vmul.f32 %v1309, %v1309
        %v1338 = vmul.f32 %v1310, %v1310
        %v1339 = vmul.f32 %v1311, %v1311
        %v1340 = vsel %vm1154, %v1313, 0.0
        %v1341 = vadd.f32 %v1312, %v1340
        %1342 = vadd.xlane.f32.xlu0 %v1341
        %v1343 = vpop.xlane.xlu0 %1342
        %v1344 = vsel %vm1154, %v1315, 0.0
        %v1345 = vadd.f32 %v1314, %v1344
        %1346 = vadd.xlane.f32.xlu0 %v1345
        %v1347 = vpop.xlane.xlu0 %1346
        %v1348 = vsel %vm1154, %v1317, 0.0
        %v1349 = vadd.f32 %v1316, %v1348
        %1350 = vadd.xlane.f32.xlu0 %v1349
        %v1351 = vpop.xlane.xlu0 %1350
        %v1352 = vsel %vm1154, %v1319, 0.0
        %v1353 = vadd.f32 %v1318, %v1352
        %1354 = vadd.xlane.f32.xlu0 %v1353
        %v1355 = vpop.xlane.xlu0 %1354
        %v1356 = vsel %vm1154, %v1321, 0.0
        %v1357 = vadd.f32 %v1320, %v1356
        %1358 = vadd.xlane.f32.xlu0 %v1357
        %v1359 = vpop.xlane.xlu0 %1358
        %v1360 = vsel %vm1154, %v1323, 0.0
        %v1361 = vadd.f32 %v1322, %v1360
        %1362 = vadd.xlane.f32.xlu0 %v1361
        %v1363 = vpop.xlane.xlu0 %1362
        %v1364 = vsel %vm1154, %v1325, 0.0
        %v1365 = vadd.f32 %v1324, %v1364
        %1366 = vadd.xlane.f32.xlu0 %v1365
        %v1367 = vpop.xlane.xlu0 %1366
        %v1368 = vsel %vm1154, %v1327, 0.0
        %v1369 = vadd.f32 %v1326, %v1368
        %1370 = vadd.xlane.f32.xlu0 %v1369
        %v1371 = vpop.xlane.xlu0 %1370
        %v1372 = vsel %vm1154, %v1329, 0.0
        %v1373 = vadd.f32 %v1328, %v1372
        %1374 = vadd.xlane.f32.xlu0 %v1373
        %v1375 = vpop.xlane.xlu0 %1374
        %v1376 = vsel %vm1154, %v1331, 0.0
        %v1377 = vadd.f32 %v1330, %v1376
        %1378 = vadd.xlane.f32.xlu0 %v1377
        %v1379 = vpop.xlane.xlu0 %1378
        %v1380 = vsel %vm1154, %v1333, 0.0
        %v1381 = vadd.f32 %v1332, %v1380
        %1382 = vadd.xlane.f32.xlu0 %v1381
        %v1383 = vpop.xlane.xlu0 %1382
        %v1384 = vsel %vm1154, %v1335, 0.0
        %v1385 = vadd.f32 %v1334, %v1384
        %1386 = vadd.xlane.f32.xlu0 %v1385
        %v1387 = vpop.xlane.xlu0 %1386
        %v1388 = vsel %vm1154, %v1337, 0.0
        %v1389 = vadd.f32 %v1336, %v1388
        %1390 = vadd.xlane.f32.xlu0 %v1389
        %v1391 = vpop.xlane.xlu0 %1390
        %v1392 = vsel %vm1154, %v1339, 0.0
        %v1393 = vadd.f32 %v1338, %v1392
        %1394 = vadd.xlane.f32.xlu0 %v1393
        %v1395 = vpop.xlane.xlu0 %1394
        %v1396 = vmul.f32 %v1343, 0.0051020407
        %v1397 = vmul.f32 %v1347, 0.0051020407
        %v1398 = vmul.f32 %v1351, 0.0051020407
        %v1399 = vmul.f32 %v1355, 0.0051020407
        %v1400 = vmul.f32 %v1359, 0.0051020407
        %v1401 = vmul.f32 %v1363, 0.0051020407
        %v1402 = vmul.f32 %v1367, 0.0051020407
        %v1403 = vmul.f32 %v1371, 0.0051020407
        %v1404 = vmul.f32 %v1375, 0.0051020407
        %v1405 = vmul.f32 %v1379, 0.0051020407
        %v1406 = vmul.f32 %v1383, 0.0051020407
        %v1407 = vmul.f32 %v1387, 0.0051020407
        %v1408 = vmul.f32 %v1391, 0.0051020407
        %v1409 = vmul.f32 %v1395, 0.0051020407
        %v1410 = vadd.f32 %v1396, 1e-05
        %v1411 = vadd.f32 %v1397, 1e-05
        %v1412 = vadd.f32 %v1398, 1e-05
        %v1413 = vadd.f32 %v1399, 1e-05
        %v1414 = vadd.f32 %v1400, 1e-05
        %v1415 = vadd.f32 %v1401, 1e-05
        %v1416 = vadd.f32 %v1402, 1e-05
        %v1417 = vadd.f32 %v1403, 1e-05
        %v1418 = vadd.f32 %v1404, 1e-05
        %v1419 = vadd.f32 %v1405, 1e-05
        %v1420 = vadd.f32 %v1406, 1e-05
        %v1421 = vadd.f32 %v1407, 1e-05
        %v1422 = vadd.f32 %v1408, 1e-05
        %v1423 = vadd.f32 %v1409, 1e-05
        %v1424 = vrsqrt.pop %v1410
        %v1425 = vmul.f32 %v1424, %v1410
        %v1426 = vmul.f32 %v1425, %v1424
        %v1427 = vmul.f32 0.5, %v1426
        %v1428 = vsub.f32 1.5, %v1427
        %v1429 = vmul.f32 %v1424, %v1428
        %vm1430 = vweird.f32 %v1410
        %vm1431 = vweird.f32 %v1424
        %vm1432 = vmor %vm1430, %vm1431
        %v1433 = vsel %vm1432, %v1424, %v1429
        %v1434 = vrsqrt.pop %v1411
        %v1435 = vmul.f32 %v1434, %v1411
        %v1436 = vmul.f32 %v1435, %v1434
        %v1437 = vmul.f32 0.5, %v1436
        %v1438 = vsub.f32 1.5, %v1437
        %v1439 = vmul.f32 %v1434, %v1438
        %vm1440 = vweird.f32 %v1411
        %vm1441 = vweird.f32 %v1434
        %vm1442 = vmor %vm1440, %vm1441
        %v1443 = vsel %vm1442, %v1434, %v1439
        %v1444 = vrsqrt.pop %v1412
        %v1445 = vmul.f32 %v1444, %v1412
        %v1446 = vmul.f32 %v1445, %v1444
        %v1447 = vmul.f32 0.5, %v1446
        %v1448 = vsub.f32 1.5, %v1447
        %v1449 = vmul.f32 %v1444, %v1448
        %vm1450 = vweird.f32 %v1412
        %vm1451 = vweird.f32 %v1444
        %vm1452 = vmor %vm1450, %vm1451
        %v1453 = vsel %vm1452, %v1444, %v1449
        %v1454 = vrsqrt.pop %v1413
        %v1455 = vmul.f32 %v1454, %v1413
        %v1456 = vmul.f32 %v1455, %v1454
        %v1457 = vmul.f32 0.5, %v1456
        %v1458 = vsub.f32 1.5, %v1457
        %v1459 = vmul.f32 %v1454, %v1458
        %vm1460 = vweird.f32 %v1413
        %vm1461 = vweird.f32 %v1454
        %vm1462 = vmor %vm1460, %vm1461
        %v1463 = vsel %vm1462, %v1454, %v1459
        %v1464 = vrsqrt.pop %v1414
        %v1465 = vmul.f32 %v1464, %v1414
        %v1466 = vmul.f32 %v1465, %v1464
        %v1467 = vmul.f32 0.5, %v1466
        %v1468 = vsub.f32 1.5, %v1467
        %v1469 = vmul.f32 %v1464, %v1468
        %vm1470 = vweird.f32 %v1414
        %vm1471 = vweird.f32 %v1464
        %vm1472 = vmor %vm1470, %vm1471
        %v1473 = vsel %vm1472, %v1464, %v1469
        %v1474 = vrsqrt.pop %v1415
        %v1475 = vmul.f32 %v1474, %v1415
        %v1476 = vmul.f32 %v1475, %v1474
        %v1477 = vmul.f32 0.5, %v1476
        %v1478 = vsub.f32 1.5, %v1477
        %v1479 = vmul.f32 %v1474, %v1478
        %vm1480 = vweird.f32 %v1415
        %vm1481 = vweird.f32 %v1474
        %vm1482 = vmor %vm1480, %vm1481
        %v1483 = vsel %vm1482, %v1474, %v1479
        %v1484 = vrsqrt.pop %v1416
        %v1485 = vmul.f32 %v1484, %v1416
        %v1486 = vmul.f32 %v1485, %v1484
        %v1487 = vmul.f32 0.5, %v1486
        %v1488 = vsub.f32 1.5, %v1487
        %v1489 = vmul.f32 %v1484, %v1488
        %vm1490 = vweird.f32 %v1416
        %vm1491 = vweird.f32 %v1484
        %vm1492 = vmor %vm1490, %vm1491
        %v1493 = vsel %vm1492, %v1484, %v1489
        %v1494 = vrsqrt.pop %v1417
        %v1495 = vmul.f32 %v1494, %v1417
        %v1496 = vmul.f32 %v1495, %v1494
        %v1497 = vmul.f32 0.5, %v1496
        %v1498 = vsub.f32 1.5, %v1497
        %v1499 = vmul.f32 %v1494, %v1498
        %vm1500 = vweird.f32 %v1417
        %vm1501 = vweird.f32 %v1494
        %vm1502 = vmor %vm1500, %vm1501
        %v1503 = vsel %vm1502, %v1494, %v1499
        %v1504 = vrsqrt.pop %v1418
        %v1505 = vmul.f32 %v1504, %v1418
        %v1506 = vmul.f32 %v1505, %v1504
        %v1507 = vmul.f32 0.5, %v1506
        %v1508 = vsub.f32 1.5, %v1507
        %v1509 = vmul.f32 %v1504, %v1508
        %vm1510 = vweird.f32 %v1418
        %vm1511 = vweird.f32 %v1504
        %vm1512 = vmor %vm1510, %vm1511
        %v1513 = vsel %vm1512, %v1504, %v1509
        %v1514 = vrsqrt.pop %v1419
        %v1515 = vmul.f32 %v1514, %v1419
        %v1516 = vmul.f32 %v1515, %v1514
        %v1517 = vmul.f32 0.5, %v1516
        %v1518 = vsub.f32 1.5, %v1517
        %v1519 = vmul.f32 %v1514, %v1518
        %vm1520 = vweird.f32 %v1419
        %vm1521 = vweird.f32 %v1514
        %vm1522 = vmor %vm1520, %vm1521
        %v1523 = vsel %vm1522, %v1514, %v1519
        %v1524 = vrsqrt.pop %v1420
        %v1525 = vmul.f32 %v1524, %v1420
        %v1526 = vmul.f32 %v1525, %v1524
        %v1527 = vmul.f32 0.5, %v1526
        %v1528 = vsub.f32 1.5, %v1527
        %v1529 = vmul.f32 %v1524, %v1528
        %vm1530 = vweird.f32 %v1420
        %vm1531 = vweird.f32 %v1524
        %vm1532 = vmor %vm1530, %vm1531
        %v1533 = vsel %vm1532, %v1524, %v1529
        %v1534 = vrsqrt.pop %v1421
        %v1535 = vmul.f32 %v1534, %v1421
        %v1536 = vmul.f32 %v1535, %v1534
        %v1537 = vmul.f32 0.5, %v1536
        %v1538 = vsub.f32 1.5, %v1537
        %v1539 = vmul.f32 %v1534, %v1538
        %vm1540 = vweird.f32 %v1421
        %vm1541 = vweird.f32 %v1534
        %vm1542 = vmor %vm1540, %vm1541
        %v1543 = vsel %vm1542, %v1534, %v1539
        %v1544 = vrsqrt.pop %v1422
        %v1545 = vmul.f32 %v1544, %v1422
        %v1546 = vmul.f32 %v1545, %v1544
        %v1547 = vmul.f32 0.5, %v1546
        %v1548 = vsub.f32 1.5, %v1547
        %v1549 = vmul.f32 %v1544, %v1548
        %vm1550 = vweird.f32 %v1422
        %vm1551 = vweird.f32 %v1544
        %vm1552 = vmor %vm1550, %vm1551
        %v1553 = vsel %vm1552, %v1544, %v1549
        %v1554 = vrsqrt.pop %v1423
        %v1555 = vmul.f32 %v1554, %v1423
        %v1556 = vmul.f32 %v1555, %v1554
        %v1557 = vmul.f32 0.5, %v1556
        %v1558 = vsub.f32 1.5, %v1557
        %v1559 = vmul.f32 %v1554, %v1558
        %vm1560 = vweird.f32 %v1423
        %vm1561 = vweird.f32 %v1554
        %vm1562 = vmor %vm1560, %vm1561
        %v1563 = vsel %vm1562, %v1554, %v1559
        %v1564 = vld [vmem:[%s352] sm:$0xff]
        %v1565 = vld [vmem:[%s352 + $0x8] sm:$0xff]
        %v1566 = vld [vmem:[%s352 + $0x10] sm:$0xff]
        %v1567 = vld [vmem:[%s352 + $0x18] sm:$0xff]
        %v1568 = vld [vmem:[%s352 + $0x20] sm:$0xff]
        %v1569 = vld [vmem:[%s352 + $0x28] sm:$0xff]
        %v1570 = vld [vmem:[%s352 + $0x30] sm:$0xff]
        %v1571 = vld [vmem:[%s352 + $0x38] sm:$0xff]
        %v1572 = vld [vmem:[%s352 + $0x40] sm:$0xff]
        %v1573 = vld [vmem:[%s352 + $0x48] sm:$0xff]
        %v1574 = vld [vmem:[%s352 + $0x50] sm:$0xff]
        %v1575 = vld [vmem:[%s352 + $0x58] sm:$0xff]
        %v1576 = vld [vmem:[%s352 + $0x60] sm:$0xff]
        %v1577 = vld [vmem:[%s352 + $0x68] sm:$0xff]
        %v1578 = vmul.f32 %v1433, %v1564
        %v1579 = vmul.f32 %v1443, %v1565
        %v1580 = vmul.f32 %v1453, %v1566
        %v1581 = vmul.f32 %v1463, %v1567
        %v1582 = vmul.f32 %v1473, %v1568
        %v1583 = vmul.f32 %v1483, %v1569
        %v1584 = vmul.f32 %v1493, %v1570
        %v1585 = vmul.f32 %v1503, %v1571
        %v1586 = vmul.f32 %v1513, %v1572
        %v1587 = vmul.f32 %v1523, %v1573
        %v1588 = vmul.f32 %v1533, %v1574
        %v1589 = vmul.f32 %v1543, %v1575
        %v1590 = vmul.f32 %v1553, %v1576
        %v1591 = vmul.f32 %v1563, %v1577
        %1593 = vset.pattern.permute.xlu0 0
        %1594 = vperm.xlu0 %1593, %v1578
        %v1595 = vpop.permute.xlu0 %1594
        %1598 = vset.pattern.permute.xlu0 0
        %1599 = vperm.xlu0 %1598, %v1579
        %v1600 = vpop.permute.xlu0 %1599
        %1603 = vset.pattern.permute.xlu0 0
        %1604 = vperm.xlu0 %1603, %v1580
        %v1605 = vpop.permute.xlu0 %1604
        %1608 = vset.pattern.permute.xlu0 0
        %1609 = vperm.xlu0 %1608, %v1581
        %v1610 = vpop.permute.xlu0 %1609
        %1613 = vset.pattern.permute.xlu0 0
        %1614 = vperm.xlu0 %1613, %v1582
        %v1615 = vpop.permute.xlu0 %1614
        %1618 = vset.pattern.permute.xlu0 0
        %1619 = vperm.xlu0 %1618, %v1583
        %v1620 = vpop.permute.xlu0 %1619
        %1623 = vset.pattern.permute.xlu0 0
        %1624 = vperm.xlu0 %1623, %v1584
        %v1625 = vpop.permute.xlu0 %1624
        %1628 = vset.pattern.permute.xlu0 0
        %1629 = vperm.xlu0 %1628, %v1585
        %v1630 = vpop.permute.xlu0 %1629
        %1633 = vset.pattern.permute.xlu0 0
        %1634 = vperm.xlu0 %1633, %v1586
        %v1635 = vpop.permute.xlu0 %1634
        %1638 = vset.pattern.permute.xlu0 0
        %1639 = vperm.xlu0 %1638, %v1587
        %v1640 = vpop.permute.xlu0 %1639
        %1643 = vset.pattern.permute.xlu0 0
        %1644 = vperm.xlu0 %1643, %v1588
        %v1645 = vpop.permute.xlu0 %1644
        %1648 = vset.pattern.permute.xlu0 0
        %1649 = vperm.xlu0 %1648, %v1589
        %v1650 = vpop.permute.xlu0 %1649
        %1653 = vset.pattern.permute.xlu0 0
        %1654 = vperm.xlu0 %1653, %v1590
        %v1655 = vpop.permute.xlu0 %1654
        %1658 = vset.pattern.permute.xlu0 0
        %1659 = vperm.xlu0 %1658, %v1591
        %v1660 = vpop.permute.xlu0 %1659
        %v1662 = vmul.f32 %v1284, %v1595
        %v1663 = vmul.f32 %v1285, %v1595
        %v1664 = vmul.f32 %v1286, %v1600
        %v1665 = vmul.f32 %v1287, %v1600
        %v1666 = vmul.f32 %v1288, %v1605
        %v1667 = vmul.f32 %v1289, %v1605
        %v1668 = vmul.f32 %v1290, %v1610
        %v1669 = vmul.f32 %v1291, %v1610
        %v1670 = vmul.f32 %v1292, %v1615
        %v1671 = vmul.f32 %v1293, %v1615
        %v1672 = vmul.f32 %v1294, %v1620
        %v1673 = vmul.f32 %v1295, %v1620
        %v1674 = vmul.f32 %v1296, %v1625
        %v1675 = vmul.f32 %v1297, %v1625
        %v1676 = vmul.f32 %v1298, %v1630
        %v1677 = vmul.f32 %v1299, %v1630
        %v1678 = vmul.f32 %v1300, %v1635
        %v1679 = vmul.f32 %v1301, %v1635
        %v1680 = vmul.f32 %v1302, %v1640
        %v1681 = vmul.f32 %v1303, %v1640
        %v1682 = vmul.f32 %v1304, %v1645
        %v1683 = vmul.f32 %v1305, %v1645
        %v1684 = vmul.f32 %v1306, %v1650
        %v1685 = vmul.f32 %v1307, %v1650
        %v1686 = vmul.f32 %v1308, %v1655
        %v1687 = vmul.f32 %v1309, %v1655
        %v1688 = vmul.f32 %v1310, %v1660
        %v1689 = vmul.f32 %v1311, %v1660
        %v1690 = vld [vmem:[%s358] sm:$0xff]
        %v1691 = vld [vmem:[%s358 + $0x8] sm:$0xff]
        %v1692 = vld [vmem:[%s358 + $0x10] sm:$0xff]
        %v1693 = vld [vmem:[%s358 + $0x18] sm:$0xff]
        %v1694 = vld [vmem:[%s358 + $0x20] sm:$0xff]
        %v1695 = vld [vmem:[%s358 + $0x28] sm:$0xff]
        %v1696 = vld [vmem:[%s358 + $0x30] sm:$0xff]
        %v1697 = vld [vmem:[%s358 + $0x38] sm:$0xff]
        %v1698 = vld [vmem:[%s358 + $0x40] sm:$0xff]
        %v1699 = vld [vmem:[%s358 + $0x48] sm:$0xff]
        %v1700 = vld [vmem:[%s358 + $0x50] sm:$0xff]
        %v1701 = vld [vmem:[%s358 + $0x58] sm:$0xff]
        %v1702 = vld [vmem:[%s358 + $0x60] sm:$0xff]
        %v1703 = vld [vmem:[%s358 + $0x68] sm:$0xff]
        %1705 = vset.pattern.permute.xlu0 0
        %1706 = vperm.xlu0 %1705, %v1690
        %v1707 = vpop.permute.xlu0 %1706
        %1710 = vset.pattern.permute.xlu0 0
        %1711 = vperm.xlu0 %1710, %v1691
        %v1712 = vpop.permute.xlu0 %1711
        %1715 = vset.pattern.permute.xlu0 0
        %1716 = vperm.xlu0 %1715, %v1692
        %v1717 = vpop.permute.xlu0 %1716
        %1720 = vset.pattern.permute.xlu0 0
        %1721 = vperm.xlu0 %1720, %v1693
        %v1722 = vpop.permute.xlu0 %1721
        %1725 = vset.pattern.permute.xlu0 0
        %1726 = vperm.xlu0 %1725, %v1694
        %v1727 = vpop.permute.xlu0 %1726
        %1730 = vset.pattern.permute.xlu0 0
        %1731 = vperm.xlu0 %1730, %v1695
        %v1732 = vpop.permute.xlu0 %1731
        %1735 = vset.pattern.permute.xlu0 0
        %1736 = vperm.xlu0 %1735, %v1696
        %v1737 = vpop.permute.xlu0 %1736
        %1740 = vset.pattern.permute.xlu0 0
        %1741 = vperm.xlu0 %1740, %v1697
        %v1742 = vpop.permute.xlu0 %1741
        %1745 = vset.pattern.permute.xlu0 0
        %1746 = vperm.xlu0 %1745, %v1698
        %v1747 = vpop.permute.xlu0 %1746
        %1750 = vset.pattern.permute.xlu0 0
        %1751 = vperm.xlu0 %1750, %v1699
        %v1752 = vpop.permute.xlu0 %1751
        %1755 = vset.pattern.permute.xlu0 0
        %1756 = vperm.xlu0 %1755, %v1700
        %v1757 = vpop.permute.xlu0 %1756
        %1760 = vset.pattern.permute.xlu0 0
        %1761 = vperm.xlu0 %1760, %v1701
        %v1762 = vpop.permute.xlu0 %1761
        %1765 = vset.pattern.permute.xlu0 0
        %1766 = vperm.xlu0 %1765, %v1702
        %v1767 = vpop.permute.xlu0 %1766
        %1770 = vset.pattern.permute.xlu0 0
        %1771 = vperm.xlu0 %1770, %v1703
        %v1772 = vpop.permute.xlu0 %1771
        %v1774 = vadd.f32 %v1662, %v1707
        %v1775 = vadd.f32 %v1663, %v1707
        %v1776 = vadd.f32 %v1664, %v1712
        %v1777 = vadd.f32 %v1665, %v1712
        %v1778 = vadd.f32 %v1666, %v1717
        %v1779 = vadd.f32 %v1667, %v1717
        %v1780 = vadd.f32 %v1668, %v1722
        %v1781 = vadd.f32 %v1669, %v1722
        %v1782 = vadd.f32 %v1670, %v1727
        %v1783 = vadd.f32 %v1671, %v1727
        %v1784 = vadd.f32 %v1672, %v1732
        %v1785 = vadd.f32 %v1673, %v1732
        %v1786 = vadd.f32 %v1674, %v1737
        %v1787 = vadd.f32 %v1675, %v1737
        %v1788 = vadd.f32 %v1676, %v1742
        %v1789 = vadd.f32 %v1677, %v1742
        %v1790 = vadd.f32 %v1678, %v1747
        %v1791 = vadd.f32 %v1679, %v1747
        %v1792 = vadd.f32 %v1680, %v1752
        %v1793 = vadd.f32 %v1681, %v1752
        %v1794 = vadd.f32 %v1682, %v1757
        %v1795 = vadd.f32 %v1683, %v1757
        %v1796 = vadd.f32 %v1684, %v1762
        %v1797 = vadd.f32 %v1685, %v1762
        %v1798 = vadd.f32 %v1686, %v1767
        %v1799 = vadd.f32 %v1687, %v1767
        %v1800 = vadd.f32 %v1688, %v1772
        %v1801 = vadd.f32 %v1689, %v1772
        %1802 = vst [vmem:[%s365] sm:$0xff] %v1774
        %1803 = vst.msk [vmem:[%s365 + $0x8] sm:$0xff] %vm1154, %v1775
        %1804 = vst [vmem:[%s365 + $0x10] sm:$0xff] %v1776
        %1805 = vst.msk [vmem:[%s365 + $0x18] sm:$0xff] %vm1154, %v1777
        %1806 = vst [vmem:[%s365 + $0x20] sm:$0xff] %v1778
        %1807 = vst.msk [vmem:[%s365 + $0x28] sm:$0xff] %vm1154, %v1779
        %1808 = vst [vmem:[%s365 + $0x30] sm:$0xff] %v1780
        %1809 = vst.msk [vmem:[%s365 + $0x38] sm:$0xff] %vm1154, %v1781
        %1810 = vst [vmem:[%s365 + $0x40] sm:$0xff] %v1782
        %1811 = vst.msk [vmem:[%s365 + $0x48] sm:$0xff] %vm1154, %v1783
        %1812 = vst [vmem:[%s365 + $0x50] sm:$0xff] %v1784
        %1813 = vst.msk [vmem:[%s365 + $0x58] sm:$0xff] %vm1154, %v1785
        %1814 = vst [vmem:[%s365 + $0x60] sm:$0xff] %v1786
        %1815 = vst.msk [vmem:[%s365 + $0x68] sm:$0xff] %vm1154, %v1787
        %1816 = vst [vmem:[%s365 + $0x70] sm:$0xff] %v1788
        %1817 = vst.msk [vmem:[%s365 + $0x78] sm:$0xff] %vm1154, %v1789
        %1818 = vst [vmem:[%s365 + $0x80] sm:$0xff] %v1790
        %1819 = vst.msk [vmem:[%s365 + $0x88] sm:$0xff] %vm1154, %v1791
        %1820 = vst [vmem:[%s365 + $0x90] sm:$0xff] %v1792
        %1821 = vst.msk [vmem:[%s365 + $0x98] sm:$0xff] %vm1154, %v1793
        %1822 = vst [vmem:[%s365 + $0xa0] sm:$0xff] %v1794
        %1823 = vst.msk [vmem:[%s365 + $0xa8] sm:$0xff] %vm1154, %v1795
        %1824 = vst [vmem:[%s365 + $0xb0] sm:$0xff] %v1796
        %1825 = vst.msk [vmem:[%s365 + $0xb8] sm:$0xff] %vm1154, %v1797
        %1826 = vst [vmem:[%s365 + $0xc0] sm:$0xff] %v1798
        %1827 = vst.msk [vmem:[%s365 + $0xc8] sm:$0xff] %vm1154, %v1799
        %1828 = vst [vmem:[%s365 + $0xd0] sm:$0xff] %v1800
        %1829 = vst.msk [vmem:[%s365 + $0xd8] sm:$0xff] %vm1154, %v1801
        %vm1830 = vcmask 7168
        %1831 = vst.msk [vmem:[%s371] sm:$0xff] %vm1830, %v1270
        %1832 = vst.msk [vmem:[%s371 + $0x8] sm:$0xff] %vm1830, %v1271
        %1833 = vst.msk [vmem:[%s371 + $0x10] sm:$0xff] %vm1830, %v1272
        %1834 = vst.msk [vmem:[%s371 + $0x18] sm:$0xff] %vm1830, %v1273
        %1835 = vst.msk [vmem:[%s371 + $0x20] sm:$0xff] %vm1830, %v1274
        %1836 = vst.msk [vmem:[%s371 + $0x28] sm:$0xff] %vm1830, %v1275
        %1837 = vst.msk [vmem:[%s371 + $0x30] sm:$0xff] %vm1830, %v1276
        %1838 = vst.msk [vmem:[%s371 + $0x38] sm:$0xff] %vm1830, %v1277
        %1839 = vst.msk [vmem:[%s371 + $0x40] sm:$0xff] %vm1830, %v1278
        %1840 = vst.msk [vmem:[%s371 + $0x48] sm:$0xff] %vm1830, %v1279
        %1841 = vst.msk [vmem:[%s371 + $0x50] sm:$0xff] %vm1830, %v1280
        %1842 = vst.msk [vmem:[%s371 + $0x58] sm:$0xff] %vm1830, %v1281
        %1843 = vst.msk [vmem:[%s371 + $0x60] sm:$0xff] %vm1830, %v1282
        %1844 = vst.msk [vmem:[%s371 + $0x68] sm:$0xff] %vm1830, %v1283
        %1845 = vst.msk [vmem:[%s377] sm:$0xff] %vm1830, %v1396
        %1846 = vst.msk [vmem:[%s377 + $0x8] sm:$0xff] %vm1830, %v1397
        %1847 = vst.msk [vmem:[%s377 + $0x10] sm:$0xff] %vm1830, %v1398
        %1848 = vst.msk [vmem:[%s377 + $0x18] sm:$0xff] %vm1830, %v1399
        %1849 = vst.msk [vmem:[%s377 + $0x20] sm:$0xff] %vm1830, %v1400
        %1850 = vst.msk [vmem:[%s377 + $0x28] sm:$0xff] %vm1830, %v1401
        %1851 = vst.msk [vmem:[%s377 + $0x30] sm:$0xff] %vm1830, %v1402
        %1852 = vst.msk [vmem:[%s377 + $0x38] sm:$0xff] %vm1830, %v1403
        %1853 = vst.msk [vmem:[%s377 + $0x40] sm:$0xff] %vm1830, %v1404
        %1854 = vst.msk [vmem:[%s377 + $0x48] sm:$0xff] %vm1830, %v1405
        %1855 = vst.msk [vmem:[%s377 + $0x50] sm:$0xff] %vm1830, %v1406
        %1856 = vst.msk [vmem:[%s377 + $0x58] sm:$0xff] %vm1830, %v1407
        %1857 = vst.msk [vmem:[%s377 + $0x60] sm:$0xff] %vm1830, %v1408
        %1858 = vst.msk [vmem:[%s377 + $0x68] sm:$0xff] %vm1830, %v1409
      $region48: #{tpu_custom_call.1} parent=39 // pred_fallthru
        _
      %s1859 = smul.u32 14, %s23
      %p1860 = scmp.lt.s32.totalorder %s1859, 13
      %s1861 = scalar_select %p1860, %s1859, 13
      %s1862 = smul.addr %s1861, 2
      %s1863 = smul.addr %s1862, 8
      %s1864 = scalar_lea.vmem %s5, %s1863
      %s1865 = smul.u32 14, %s23
      %p1866 = scmp.lt.s32.totalorder %s1865, 13
      %s1867 = scalar_select %p1866, %s1865, 13
      %s1868 = smul.addr %s1867, 8
      %s1869 = scalar_lea.vmem %s6, %s1868
      %s1870 = smul.u32 14, %s23
      %p1871 = scmp.lt.s32.totalorder %s1870, 13
      %s1872 = scalar_select %p1871, %s1870, 13
      %s1873 = smul.addr %s1872, 8
      %s1874 = scalar_lea.vmem %s7, %s1873
      // Predicated region
      $region49: #{tpu_custom_call.1} parent=39 // pred_check
        %p1875 = pneg %p171
      $region50: #{tpu_custom_call.1} parent=39 // pred_check_branch
        %1877 = sbr.rel (%p1875) target = $region52
      $region51: #{tpu_custom_call.1} parent=39 // pred_region
        %s1878 = smul.u32 14, %s23
      $region52: #{tpu_custom_call.1} parent=39 // pred_fallthru
        _
      // Predicated region
      $region53: #{tpu_custom_call.1} parent=39 // pred_check
        %p1879 = pneg %p197
      $region54: #{tpu_custom_call.1} parent=39 // pred_check_branch
        %1881 = sbr.rel (%p1879) target = $region56
      $region55: #{tpu_custom_call.1} parent=39 // pred_region
        %s1882 = smul.u32 14, %s23
      $region56: #{tpu_custom_call.1} parent=39 // pred_fallthru
        _
      // Predicated region
      $region57: #{tpu_custom_call.1} parent=39 // pred_check
        %p1883 = pneg %p223
      $region58: #{tpu_custom_call.1} parent=39 // pred_check_branch
        %1885 = sbr.rel (%p1883) target = $region60
      $region59: #{tpu_custom_call.1} parent=39 // pred_region
        %s1886 = smul.u32 14, %s23
      $region60: #{tpu_custom_call.1} parent=39 // pred_fallthru
        _
      // Predicated region
      $region61: #{tpu_custom_call.1} parent=39 // pred_check
        %p1887 = pneg %p171
      $region62: #{tpu_custom_call.1} parent=39 // pred_check_branch
        %1889 = sbr.rel (%p1887) target = $region64
      $region63: #{tpu_custom_call.1} parent=39 // pred_region
        %s1890 = smul.u32 14, %s23
        %p1891 = scmp.lt.s32.totalorder %s1890, 13
        %s1892 = scalar_select %p1891, %s1890, 13
        %s1893 = smul.addr %s1892, 2
        %s1894 = smul.addr %s1893, 8
        %s1895 = scalar_lea.vmem %s5, %s1894
      $region64: #{tpu_custom_call.1} parent=39 // pred_fallthru
        _
      // Predicated region
      $region65: #{tpu_custom_call.1} parent=39 // pred_check
        %p1896 = pneg %p197
      $region66: #{tpu_custom_call.1} parent=39 // pred_check_branch
        %1898 = sbr.rel (%p1896) target = $region68
      $region67: #{tpu_custom_call.1} parent=39 // pred_region
        %s1899 = smul.u32 14, %s23
        %p1900 = scmp.lt.s32.totalorder %s1899, 13
        %s1901 = scalar_select %p1900, %s1899, 13
        %s1902 = smul.addr %s1901, 8
        %s1903 = scalar_lea.vmem %s6, %s1902
      $region68: #{tpu_custom_call.1} parent=39 // pred_fallthru
        _
      // Predicated region
      $region69: #{tpu_custom_call.1} parent=39 // pred_check
        %p1904 = pneg %p223
      $region70: #{tpu_custom_call.1} parent=39 // pred_check_branch
        %1906 = sbr.rel (%p1904) target = $region72
      $region71: #{tpu_custom_call.1} parent=39 // pred_region
        %s1907 = smul.u32 14, %s23
        %p1908 = scmp.lt.s32.totalorder %s1907, 13
        %s1909 = scalar_select %p1908, %s1907, 13
        %s1910 = smul.addr %s1909, 8
        %s1911 = scalar_lea.vmem %s7, %s1910
      $region72: #{tpu_custom_call.1} parent=39 // pred_fallthru
        _
    $region40: #{tpu_custom_call.1} parent=5 // pred_fallthru
      _
    %p1912 = scmp.le.s32.totalorder 2, %s14
    // Predicated region
    $region73: #{tpu_custom_call.1} parent=5 // pred_check
      %p1913 = pneg %p1912
    $region74: #{tpu_custom_call.1} parent=5 // pred_check_branch
      %1915 = sbr.rel (%p1913) target = $region76
    $region75: #{tpu_custom_call.1} parent=5 // pred_region
      %s1916 = ssub.s32 %s14, 2
    $region76: #{tpu_custom_call.1} parent=5 // pred_fallthru
      _
  $region6: #{tpu_custom_call.1} parent=0 // loop_footer
    %s18 = sadd.s32 1, %s14
  $region7: #{tpu_custom_call.1} parent=0 // loop_footer_branch
    %13 = sbr.rel target = $region3
  $region8: #{tpu_custom_call.1} parent=0 // loop_exit
    _

</llo_original>
